<compile_context>
chip_gen: v7x
topology: tpu7x:2x2x1
jax: 0.10.0
libtpu: 0.0.40
codegen_flags: <defaults>
</compile_context>

<pallas_src>
import functools
import math

import jax
import jax.numpy as jnp
from jax.experimental import pallas as pl
from jax.experimental.pallas import tpu as pltpu

LN_EPS = 1e-12  # BERT LayerNorm eps


def _layernorm(x, g, b):
    mean = jnp.mean(x, axis=-1, keepdims=True)
    cen = x - mean
    var = jnp.mean(cen * cen, axis=-1, keepdims=True)
    return cen * jax.lax.rsqrt(var + LN_EPS) * g + b


def _gelu(x):
    # tanh approximation (EUP-friendly: tanh has its own bundle slot).
    # TODO(synk): HF BERT default is erf-GELU; tanh approx deviates by ~1e-3.
    c = math.sqrt(2.0 / math.pi)
    return 0.5 * x * (1.0 + jnp.tanh(c * (x + 0.044715 * x * x * x)))


# ----------------------------- Fused Pallas kernel -----------------------------

def _fused_bert_kernel(
    emb_ref, bias_ref, emb_ln_g_ref, emb_ln_b_ref,
    wqkv_ref, bqkv_ref, wo_ref, bo_ref, ln1_g_ref, ln1_b_ref,
    wi_ref, bi_ref, wo2_ref, bo2_ref, ln2_g_ref, ln2_b_ref,
    proj_w_ref, proj_b_ref, out_ref,
    *, num_heads, num_layers, head_dim):
    """One grid program = one batch element; all activations stay in VMEM."""
    H = num_heads * head_dim

    # Embedding LayerNorm (no zeros residual).
    x = _layernorm(emb_ref[0], emb_ln_g_ref[...], emb_ln_b_ref[...])   # (S, H) f32
    bias = bias_ref[0]                                                  # (1, S) additive key mask

    for l in range(num_layers):                                         # static unroll
        # ---- self-attention: one fused QKV matmul (N = 3H) ----
        qkv = jnp.dot(x.astype(jnp.bfloat16), wqkv_ref[l],
                      preferred_element_type=jnp.float32) + bqkv_ref[l]  # (S, 3H) f32
        ctx_heads = []
        for h in range(num_heads):
            # heads are contiguous Dh-wide lane slices of the fused QKV output
            q = qkv[:, h * head_dim:(h + 1) * head_dim]          # 1/sqrt(Dh) already folded in
            k = qkv[:, H + h * head_dim:H + (h + 1) * head_dim]
            v = qkv[:, 2 * H + h * head_dim:2 * H + (h + 1) * head_dim]
            s = jax.lax.dot_general(
                q.astype(jnp.bfloat16), k.astype(jnp.bfloat16),
                (((1,), (1,)), ((), ())),
                preferred_element_type=jnp.float32)               # (S, S)
            s = s + bias
            s = s - jnp.max(s, axis=-1, keepdims=True)
            p = jnp.exp(s)
            p = p * pl.reciprocal(jnp.sum(p, axis=-1, keepdims=True), approx=True)
            ctx_heads.append(jnp.dot(p.astype(jnp.bfloat16), v.astype(jnp.bfloat16),
                                     preferred_element_type=jnp.float32))
        ctx = jnp.concatenate(ctx_heads, axis=-1)                 # (S, H)

        attn_out = jnp.dot(ctx.astype(jnp.bfloat16), wo_ref[l],
                           preferred_element_type=jnp.float32) + bo_ref[l]
        x = _layernorm(attn_out + x, ln1_g_ref[l], ln1_b_ref[l])

        # ---- FFN ----
        hmid = jnp.dot(x.astype(jnp.bfloat16), wi_ref[l],
                       preferred_element_type=jnp.float32) + bi_ref[l]
        hmid = _gelu(hmid)
        ffn = jnp.dot(hmid.astype(jnp.bfloat16), wo2_ref[l],
                      preferred_element_type=jnp.float32) + bo2_ref[l]
        x = _layernorm(ffn + x, ln2_g_ref[l], ln2_b_ref[l])

    # ---- hidden_states[0][:, 0, :]  -> CLS token -> projector ----
    cls = x[0:1, :]                                               # (1, H)
    out = jnp.dot(cls.astype(jnp.bfloat16), proj_w_ref[...],
                  preferred_element_type=jnp.float32) + proj_b_ref[...]
    out_ref[0] = out.astype(out_ref.dtype)


# ----------------------------- One-time weight preprocessing -----------------------------

def prepare_weights(params, num_heads):
    """Stack per-layer weights, fuse Q/K/V into one [H,3H] matmul (folding 1/sqrt(Dh)
    into the Q projection), and cast matmul operands to bf16.  Runs ONCE at model
    build time, not per forward call."""
    H = params["word_emb"].shape[1]
    Dh = H // num_heads
    L = len(params["layers"])
    I = params["layers"][0]["wi"].shape[1]
    P = params["proj_w"].shape[1]
    scale = 1.0 / math.sqrt(Dh)

    def stack(f):
        return jnp.stack([f(lp) for lp in params["layers"]])

    prep = {
        "word_emb": params["word_emb"],
        "pos_emb": params["pos_emb"],
        "type_emb": params["type_emb"],
        "emb_ln_g": params["emb_ln_g"].reshape(1, H),
        "emb_ln_b": params["emb_ln_b"].reshape(1, H),
        "wqkv": stack(lambda lp: jnp.concatenate(
            [lp["wq"] * scale, lp["wk"], lp["wv"]], axis=1)).astype(jnp.bfloat16),  # (L,H,3H)
        "bqkv": stack(lambda lp: jnp.concatenate(
            [lp["bq"] * scale, lp["bk"], lp["bv"]], axis=0)).reshape(L, 1, 3 * H),  # f32
        "wo": stack(lambda lp: lp["wo"]).astype(jnp.bfloat16),                      # (L,H,H)
        "bo": stack(lambda lp: lp["bo"]).reshape(L, 1, H),
        "l1g": stack(lambda lp: lp["ln1_g"]).reshape(L, 1, H),
        "l1b": stack(lambda lp: lp["ln1_b"]).reshape(L, 1, H),
        "wi": stack(lambda lp: lp["wi"]).astype(jnp.bfloat16),                      # (L,H,I)
        "bi": stack(lambda lp: lp["bi"]).reshape(L, 1, I),
        "wo2": stack(lambda lp: lp["wo2"]).astype(jnp.bfloat16),                    # (L,I,H)
        "bo2": stack(lambda lp: lp["bo2"]).reshape(L, 1, H),
        "l2g": stack(lambda lp: lp["ln2_g"]).reshape(L, 1, H),
        "l2b": stack(lambda lp: lp["ln2_b"]).reshape(L, 1, H),
        "proj_w": params["proj_w"].astype(jnp.bfloat16),                            # (H,P)
        "proj_b": params["proj_b"].reshape(1, P),
    }
    return jax.tree_util.tree_map(jnp.asarray, prep)


# ----------------------------- Wrapper (per-call) -----------------------------

@functools.partial(jax.jit, static_argnames=("num_heads", "num_layers"))
def sentence_mappings_producer(prep, input_ids, attention_mask, num_heads, num_layers):
    B, S = input_ids.shape
    H = prep["word_emb"].shape[1]
    Dh = H // num_heads
    P = prep["proj_w"].shape[1]
    I = prep["wi"].shape[2]
    L = num_layers

    # Embedding gather (vocab table lives in HBM) + positional/type sum in XLA;
    # the embedding LayerNorm and everything after is fused into the kernel.
    word = jnp.take(prep["word_emb"], input_ids, axis=0)                # (B, S, H)
    pos = prep["pos_emb"][:S][None, :, :]
    tok = prep["type_emb"][0][None, None, :]                            # token_type_ids = 0
    emb = (word + pos + tok).astype(jnp.float32)

    # Additive key-mask bias precomputed once: (1 - m) * -1e9
    mask_bias = ((1.0 - attention_mask.astype(jnp.float32)) * -1e9).reshape(B, 1, S)

    def full(shape):
        # Whole array resident in VMEM; same block index for every grid step
        # -> Pallas keeps it resident, no re-DMA across batch iterations.
        return pl.BlockSpec(shape, lambda b, _n=len(shape): (0,) * _n)

    out = pl.pallas_call(
        functools.partial(_fused_bert_kernel, num_heads=num_heads,
                          num_layers=num_layers, head_dim=Dh),
        grid=(B,),
        in_specs=[
            pl.BlockSpec((1, S, H), lambda b: (b, 0, 0)),      # embeddings (per batch)
            pl.BlockSpec((1, 1, S), lambda b: (b, 0, 0)),      # additive mask bias
            full((1, H)), full((1, H)),                        # embedding LN gamma/beta
            full((L, H, 3 * H)), full((L, 1, 3 * H)),          # fused QKV  W / b
            full((L, H, H)), full((L, 1, H)),                  # attn out proj W / b
            full((L, 1, H)), full((L, 1, H)),                  # LN1 gamma/beta
            full((L, H, I)), full((L, 1, I)),                  # FFN in  W / b
            full((L, I, H)), full((L, 1, H)),                  # FFN out W / b
            full((L, 1, H)), full((L, 1, H)),                  # LN2 gamma/beta
            full((H, P)), full((1, P)),                        # projector W / b
        ],
        out_specs=pl.BlockSpec((1, 1, P), lambda b: (b, 0, 0)),
        out_shape=jax.ShapeDtypeStruct((B, 1, P), jnp.float32),
        compiler_params=pltpu.CompilerParams(
            dimension_semantics=("parallel",)),                # v7x: feed both TCs
    )(emb, mask_bias, prep["emb_ln_g"], prep["emb_ln_b"],
      prep["wqkv"], prep["bqkv"], prep["wo"], prep["bo"], prep["l1g"], prep["l1b"],
      prep["wi"], prep["bi"], prep["wo2"], prep["bo2"], prep["l2g"], prep["l2b"],
      prep["proj_w"], prep["proj_b"])
    return out.reshape(B, P)


# ----------------------------- Pure-JAX reference (for validation) -----------------------------

def _reference_forward(prep, input_ids, attention_mask, num_heads, num_layers):
    """Mirrors the fused kernel math (same bf16 matmul casting) in plain JAX."""
    B, S = input_ids.shape
    H = prep["word_emb"].shape[1]
    Dh = H // num_heads

    word = jnp.take(prep["word_emb"], input_ids, axis=0)
    emb = (word + prep["pos_emb"][:S][None] + prep["type_emb"][0][None, None]).astype(jnp.float32)
    x = _layernorm(emb, prep["emb_ln_g"], prep["emb_ln_b"])            # (B,S,H)
    bias = ((1.0 - attention_mask.astype(jnp.float32)) * -1e9)[:, None, :]  # (B,1,S)

    for l in range(num_layers):
        qkv = jnp.einsum("bsh,hk->bsk", x.astype(jnp.bfloat16), prep["wqkv"][l],
                         preferred_element_type=jnp.float32) + prep["bqkv"][l]
        ctx = []
        for h in range(num_heads):
            q = qkv[..., h * Dh:(h + 1) * Dh]
            k = qkv[..., H + h * Dh:H + (h + 1) * Dh]
            v = qkv[..., 2 * H + h * Dh:2 * H + (h + 1) * Dh]
            s = jnp.einsum("bqd,bkd->bqk", q.astype(jnp.bfloat16), k.astype(jnp.bfloat16),
                           preferred_element_type=jnp.float32) + bias
            s = s - jnp.max(s, axis=-1, keepdims=True)
            p = jnp.exp(s)
            p = p / jnp.sum(p, axis=-1, keepdims=True)
            ctx.append(jnp.einsum("bqk,bkd->bqd", p.astype(jnp.bfloat16),
                                  v.astype(jnp.bfloat16),
                                  preferred_element_type=jnp.float32))
        ctx = jnp.concatenate(ctx, axis=-1)
        attn = jnp.einsum("bsh,hk->bsk", ctx.astype(jnp.bfloat16), prep["wo"][l],
                          preferred_element_type=jnp.float32) + prep["bo"][l]
        x = _layernorm(attn + x, prep["l1g"][l], prep["l1b"][l])

        hmid = jnp.einsum("bsh,hi->bsi", x.astype(jnp.bfloat16), prep["wi"][l],
                          preferred_element_type=jnp.float32) + prep["bi"][l]
        hmid = _gelu(hmid)
        ffn = jnp.einsum("bsi,ih->bsh", hmid.astype(jnp.bfloat16), prep["wo2"][l],
                         preferred_element_type=jnp.float32) + prep["bo2"][l]
        x = _layernorm(ffn + x, prep["l2g"][l], prep["l2b"][l])

    cls = x[:, 0, :]
    return jnp.dot(cls.astype(jnp.bfloat16), prep["proj_w"],
                   preferred_element_type=jnp.float32) + prep["proj_b"]


# ----------------------------- Deterministic parameter init -----------------------------

def init_params(key, vocab_size, max_pos, H, I, num_layers, final_project_size):
    keys = iter(jax.random.split(key, 8 + num_layers * 8))

    def w(shape, scale=0.02):
        return (scale * jax.random.normal(next(keys), shape)).astype(jnp.float32)

    params = {
        "word_emb": w((vocab_size, H)),
        "pos_emb": w((max_pos, H)),
        "type_emb": w((2, H)),
        "emb_ln_g": jnp.ones((H,), jnp.float32),
        "emb_ln_b": jnp.zeros((H,), jnp.float32),
        "proj_w": w((H, final_project_size)),
        "proj_b": jnp.zeros((final_project_size,), jnp.float32),
        "layers": [],
    }
    for _ in range(num_layers):
        params["layers"].append({
            "wq": w((H, H)), "bq": jnp.zeros((H,), jnp.float32),
            "wk": w((H, H)), "bk": jnp.zeros((H,), jnp.float32),
            "wv": w((H, H)), "bv": jnp.zeros((H,), jnp.float32),
            "wo": w((H, H)), "bo": jnp.zeros((H,), jnp.float32),
            "ln1_g": jnp.ones((H,), jnp.float32), "ln1_b": jnp.zeros((H,), jnp.float32),
            "wi": w((H, I)), "bi": jnp.zeros((I,), jnp.float32),
            "wo2": w((I, H)), "bo2": jnp.zeros((H,), jnp.float32),
            "ln2_g": jnp.ones((H,), jnp.float32), "ln2_b": jnp.zeros((H,), jnp.float32),
        })
    return params


if __name__ == "__main__":
    # Small BERT-like config (dims fixed by the module; last dims <128 are inherent
    # to this toy config -> the narrow final output slab is unavoidable here).
    B, S = 2, 8
    hidden = 32
    num_heads = 2
    num_layers = 2
    intermediate = 64
    vocab_size = 100
    max_pos = 16
    final_project_size = 8

    params = init_params(jax.random.PRNGKey(0), vocab_size, max_pos, hidden,
                         intermediate, num_layers, final_project_size)
    prep = prepare_weights(params, num_heads)        # one-time weight preprocessing

    kid, _ = jax.random.split(jax.random.PRNGKey(0))
    input_ids = jax.random.randint(kid, (B, S), 0, vocab_size, dtype=jnp.int32)
    attention_mask = jnp.ones((B, S), dtype=jnp.int32).at[1, 6:].set(0)  # padded tail

    out = sentence_mappings_producer(prep, input_ids, attention_mask,
                                     num_heads=num_heads, num_layers=num_layers)
    out = jax.block_until_ready(out)
    assert out.shape == (B, final_project_size)
    assert out.dtype == jnp.float32
    assert bool(jnp.all(jnp.isfinite(out)))

    # Correctness check against the pure-JAX reference (same bf16 casting).
    ref = _reference_forward(prep, input_ids, attention_mask, num_heads, num_layers)
    ref = jax.block_until_ready(ref)
    assert bool(jnp.all(jnp.abs(out - ref) <= 1e-2 + 1e-2 * jnp.abs(ref))), (
        "kernel/reference mismatch")

    print("KERNEL_OK")
</pallas_src>

<mosaic_0001>
module attributes {stable_mosaic.version = 11 : i64} {
  func.func @_fused_bert_kernel(%arg0: i32, %arg1: memref<1x8x32xf32, #tpu.memory_space<vmem>>, %arg2: memref<1x1x8xf32, #tpu.memory_space<vmem>>, %arg3: memref<1x32xf32, #tpu.memory_space<vmem>>, %arg4: memref<1x32xf32, #tpu.memory_space<vmem>>, %arg5: memref<2x32x96xbf16, #tpu.memory_space<vmem>>, %arg6: memref<2x1x96xf32, #tpu.memory_space<vmem>>, %arg7: memref<2x32x32xbf16, #tpu.memory_space<vmem>>, %arg8: memref<2x1x32xf32, #tpu.memory_space<vmem>>, %arg9: memref<2x1x32xf32, #tpu.memory_space<vmem>>, %arg10: memref<2x1x32xf32, #tpu.memory_space<vmem>>, %arg11: memref<2x32x64xbf16, #tpu.memory_space<vmem>>, %arg12: memref<2x1x64xf32, #tpu.memory_space<vmem>>, %arg13: memref<2x64x32xbf16, #tpu.memory_space<vmem>>, %arg14: memref<2x1x32xf32, #tpu.memory_space<vmem>>, %arg15: memref<2x1x32xf32, #tpu.memory_space<vmem>>, %arg16: memref<2x1x32xf32, #tpu.memory_space<vmem>>, %arg17: memref<32x8xbf16, #tpu.memory_space<vmem>>, %arg18: memref<1x8xf32, #tpu.memory_space<vmem>>, %arg19: memref<1x1x8xf32, #tpu.memory_space<vmem>>) attributes {dimension_semantics = [#tpu.dimension_semantics<parallel>], iteration_bounds = array<i64: 2>, scalar_prefetch = 0 : i64, scratch_operands = 0 : i64, tpu.core_type = #tpu.core_type<tc>, window_params = [{transform_indices = @transform_0, window_bounds = array<i64: 1, 8, 32>}, {transform_indices = @transform_1, window_bounds = array<i64: 1, 1, 8>}, {pipeline_mode = #tpu.pipeline_mode<synchronous>, transform_indices = @transform_2, window_bounds = array<i64: 1, 32>}, {pipeline_mode = #tpu.pipeline_mode<synchronous>, transform_indices = @transform_3, window_bounds = array<i64: 1, 32>}, {pipeline_mode = #tpu.pipeline_mode<synchronous>, transform_indices = @transform_4, window_bounds = array<i64: 2, 32, 96>}, {pipeline_mode = #tpu.pipeline_mode<synchronous>, transform_indices = @transform_5, window_bounds = array<i64: 2, 1, 96>}, {pipeline_mode = #tpu.pipeline_mode<synchronous>, transform_indices = @transform_6, window_bounds = array<i64: 2, 32, 32>}, {pipeline_mode = #tpu.pipeline_mode<synchronous>, transform_indices = @transform_7, window_bounds = array<i64: 2, 1, 32>}, {pipeline_mode = #tpu.pipeline_mode<synchronous>, transform_indices = @transform_8, window_bounds = array<i64: 2, 1, 32>}, {pipeline_mode = #tpu.pipeline_mode<synchronous>, transform_indices = @transform_9, window_bounds = array<i64: 2, 1, 32>}, {pipeline_mode = #tpu.pipeline_mode<synchronous>, transform_indices = @transform_10, window_bounds = array<i64: 2, 32, 64>}, {pipeline_mode = #tpu.pipeline_mode<synchronous>, transform_indices = @transform_11, window_bounds = array<i64: 2, 1, 64>}, {pipeline_mode = #tpu.pipeline_mode<synchronous>, transform_indices = @transform_12, window_bounds = array<i64: 2, 64, 32>}, {pipeline_mode = #tpu.pipeline_mode<synchronous>, transform_indices = @transform_13, window_bounds = array<i64: 2, 1, 32>}, {pipeline_mode = #tpu.pipeline_mode<synchronous>, transform_indices = @transform_14, window_bounds = array<i64: 2, 1, 32>}, {pipeline_mode = #tpu.pipeline_mode<synchronous>, transform_indices = @transform_15, window_bounds = array<i64: 2, 1, 32>}, {pipeline_mode = #tpu.pipeline_mode<synchronous>, transform_indices = @transform_16, window_bounds = array<i64: 32, 8>}, {pipeline_mode = #tpu.pipeline_mode<synchronous>, transform_indices = @transform_17, window_bounds = array<i64: 1, 8>}, {transform_indices = @transform_18, window_bounds = array<i64: 1, 1, 8>}]} {
    %c0 = arith.constant 0 : index
    %c0_0 = arith.constant 0 : index
    %c0_1 = arith.constant 0 : index
    %0 = vector.load %arg1[%c0, %c0_0, %c0_1] : memref<1x8x32xf32, #tpu.memory_space<vmem>>, vector<1x8x32xf32>
    %1 = vector.shape_cast %0 : vector<1x8x32xf32> to vector<8x32xf32>
    %c0_2 = arith.constant 0 : index
    %c0_3 = arith.constant 0 : index
    %2 = vector.load %arg3[%c0_2, %c0_3] : memref<1x32xf32, #tpu.memory_space<vmem>>, vector<1x32xf32>
    %c0_4 = arith.constant 0 : index
    %c0_5 = arith.constant 0 : index
    %3 = vector.load %arg4[%c0_4, %c0_5] : memref<1x32xf32, #tpu.memory_space<vmem>>, vector<1x32xf32>
    %cst = arith.constant dense<0.000000e+00> : vector<8xf32>
    %4 = vector.multi_reduction <add>, %1, %cst [1] : vector<8x32xf32> to vector<8xf32>
    %5 = vector.shape_cast %4 : vector<8xf32> to vector<8x1xf32>
    %cst_6 = arith.constant 3.200000e+01 : f32
    %6 = vector.broadcast %cst_6 : f32 to vector<8x1xf32>
    %7 = arith.divf %5, %6 : vector<8x1xf32>
    %8 = vector.broadcast %7 : vector<8x1xf32> to vector<8x32xf32>
    %9 = arith.subf %1, %8 : vector<8x32xf32>
    %10 = arith.mulf %9, %9 : vector<8x32xf32>
    %cst_7 = arith.constant dense<0.000000e+00> : vector<8xf32>
    %11 = vector.multi_reduction <add>, %10, %cst_7 [1] : vector<8x32xf32> to vector<8xf32>
    %12 = vector.shape_cast %11 : vector<8xf32> to vector<8x1xf32>
    %cst_8 = arith.constant 3.200000e+01 : f32
    %13 = vector.broadcast %cst_8 : f32 to vector<8x1xf32>
    %14 = arith.divf %12, %13 : vector<8x1xf32>
    %cst_9 = arith.constant 9.99999996E-13 : f32
    %15 = vector.broadcast %cst_9 : f32 to vector<8x1xf32>
    %16 = arith.addf %14, %15 : vector<8x1xf32>
    %17 = math.rsqrt %16 : vector<8x1xf32>
    %18 = vector.broadcast %17 : vector<8x1xf32> to vector<8x32xf32>
    %19 = arith.mulf %9, %18 : vector<8x32xf32>
    %20 = vector.broadcast %2 : vector<1x32xf32> to vector<8x32xf32>
    %21 = arith.mulf %19, %20 : vector<8x32xf32>
    %22 = vector.broadcast %3 : vector<1x32xf32> to vector<8x32xf32>
    %23 = arith.addf %21, %22 : vector<8x32xf32>
    %c0_10 = arith.constant 0 : index
    %c0_11 = arith.constant 0 : index
    %c0_12 = arith.constant 0 : index
    %24 = vector.load %arg2[%c0_10, %c0_11, %c0_12] : memref<1x1x8xf32, #tpu.memory_space<vmem>>, vector<1x1x8xf32>
    %25 = vector.shape_cast %24 : vector<1x1x8xf32> to vector<1x8xf32>
    %26 = arith.truncf %23 : vector<8x32xf32> to vector<8x32xbf16>
    %c0_13 = arith.constant 0 : index
    %c0_14 = arith.constant 0 : index
    %c0_15 = arith.constant 0 : index
    %27 = vector.load %arg5[%c0_13, %c0_14, %c0_15] : memref<2x32x96xbf16, #tpu.memory_space<vmem>>, vector<1x32x96xbf16>
    %28 = vector.shape_cast %27 : vector<1x32x96xbf16> to vector<32x96xbf16>
    %cst_16 = arith.constant dense<0.000000e+00> : vector<8x96xf32>
    %29 = tpu.matmul %26, %28, %cst_16 {dimension_numbers = #tpu.dot_dimension_numbers<[1], [0], [0], [1], [0, 0, 1, 1], [], []>} : vector<8x32xbf16>, vector<32x96xbf16>, vector<8x96xf32> -> vector<8x96xf32>
    %c0_17 = arith.constant 0 : index
    %c0_18 = arith.constant 0 : index
    %c0_19 = arith.constant 0 : index
    %30 = vector.load %arg6[%c0_17, %c0_18, %c0_19] : memref<2x1x96xf32, #tpu.memory_space<vmem>>, vector<1x1x96xf32>
    %31 = vector.shape_cast %30 : vector<1x1x96xf32> to vector<1x96xf32>
    %32 = vector.broadcast %31 : vector<1x96xf32> to vector<8x96xf32>
    %33 = arith.addf %29, %32 : vector<8x96xf32>
    %34 = vector.extract_strided_slice %33 {offsets = [0, 0], sizes = [8, 16], strides = [1, 1]} : vector<8x96xf32> to vector<8x16xf32>
    %35 = vector.extract_strided_slice %33 {offsets = [0, 32], sizes = [8, 16], strides = [1, 1]} : vector<8x96xf32> to vector<8x16xf32>
    %36 = vector.extract_strided_slice %33 {offsets = [0, 64], sizes = [8, 16], strides = [1, 1]} : vector<8x96xf32> to vector<8x16xf32>
    %37 = arith.truncf %34 : vector<8x16xf32> to vector<8x16xbf16>
    %38 = arith.truncf %35 : vector<8x16xf32> to vector<8x16xbf16>
    %cst_20 = arith.constant dense<0.000000e+00> : vector<8x8xf32>
    %39 = tpu.matmul %37, %38, %cst_20 {dimension_numbers = #tpu.dot_dimension_numbers<[1], [1], [0], [0], [0, 0, 1, 0], [], []>} : vector<8x16xbf16>, vector<8x16xbf16>, vector<8x8xf32> -> vector<8x8xf32>
    %40 = vector.broadcast %25 : vector<1x8xf32> to vector<8x8xf32>
    %41 = arith.addf %39, %40 : vector<8x8xf32>
    %cst_21 = arith.constant dense<0xFF800000> : vector<8xf32>
    %42 = vector.multi_reduction <maximumf>, %41, %cst_21 [1] : vector<8x8xf32> to vector<8xf32>
    %43 = vector.shape_cast %42 : vector<8xf32> to vector<8x1xf32>
    %44 = vector.broadcast %43 : vector<8x1xf32> to vector<8x8xf32>
    %45 = arith.subf %41, %44 : vector<8x8xf32>
    %46 = math.exp %45 : vector<8x8xf32>
    %cst_22 = arith.constant dense<0.000000e+00> : vector<8xf32>
    %47 = vector.multi_reduction <add>, %46, %cst_22 [1] : vector<8x8xf32> to vector<8xf32>
    %48 = vector.shape_cast %47 : vector<8xf32> to vector<8x1xf32>
    %49 = tpu.reciprocal %48 {approx = true} : vector<8x1xf32> -> vector<8x1xf32>
    %50 = vector.broadcast %49 : vector<8x1xf32> to vector<8x8xf32>
    %51 = arith.mulf %46, %50 : vector<8x8xf32>
    %52 = arith.truncf %51 : vector<8x8xf32> to vector<8x8xbf16>
    %53 = arith.truncf %36 : vector<8x16xf32> to vector<8x16xbf16>
    %cst_23 = arith.constant dense<0.000000e+00> : vector<8x16xf32>
    %54 = tpu.matmul %52, %53, %cst_23 {dimension_numbers = #tpu.dot_dimension_numbers<[1], [0], [0], [1], [0, 0, 1, 1], [], []>} : vector<8x8xbf16>, vector<8x16xbf16>, vector<8x16xf32> -> vector<8x16xf32>
    %55 = vector.extract_strided_slice %33 {offsets = [0, 16], sizes = [8, 16], strides = [1, 1]} : vector<8x96xf32> to vector<8x16xf32>
    %56 = vector.extract_strided_slice %33 {offsets = [0, 48], sizes = [8, 16], strides = [1, 1]} : vector<8x96xf32> to vector<8x16xf32>
    %57 = vector.extract_strided_slice %33 {offsets = [0, 80], sizes = [8, 16], strides = [1, 1]} : vector<8x96xf32> to vector<8x16xf32>
    %58 = arith.truncf %55 : vector<8x16xf32> to vector<8x16xbf16>
    %59 = arith.truncf %56 : vector<8x16xf32> to vector<8x16xbf16>
    %cst_24 = arith.constant dense<0.000000e+00> : vector<8x8xf32>
    %60 = tpu.matmul %58, %59, %cst_24 {dimension_numbers = #tpu.dot_dimension_numbers<[1], [1], [0], [0], [0, 0, 1, 0], [], []>} : vector<8x16xbf16>, vector<8x16xbf16>, vector<8x8xf32> -> vector<8x8xf32>
    %61 = vector.broadcast %25 : vector<1x8xf32> to vector<8x8xf32>
    %62 = arith.addf %60, %61 : vector<8x8xf32>
    %cst_25 = arith.constant dense<0xFF800000> : vector<8xf32>
    %63 = vector.multi_reduction <maximumf>, %62, %cst_25 [1] : vector<8x8xf32> to vector<8xf32>
    %64 = vector.shape_cast %63 : vector<8xf32> to vector<8x1xf32>
    %65 = vector.broadcast %64 : vector<8x1xf32> to vector<8x8xf32>
    %66 = arith.subf %62, %65 : vector<8x8xf32>
    %67 = math.exp %66 : vector<8x8xf32>
    %cst_26 = arith.constant dense<0.000000e+00> : vector<8xf32>
    %68 = vector.multi_reduction <add>, %67, %cst_26 [1] : vector<8x8xf32> to vector<8xf32>
    %69 = vector.shape_cast %68 : vector<8xf32> to vector<8x1xf32>
    %70 = tpu.reciprocal %69 {approx = true} : vector<8x1xf32> -> vector<8x1xf32>
    %71 = vector.broadcast %70 : vector<8x1xf32> to vector<8x8xf32>
    %72 = arith.mulf %67, %71 : vector<8x8xf32>
    %73 = arith.truncf %72 : vector<8x8xf32> to vector<8x8xbf16>
    %74 = arith.truncf %57 : vector<8x16xf32> to vector<8x16xbf16>
    %cst_27 = arith.constant dense<0.000000e+00> : vector<8x16xf32>
    %75 = tpu.matmul %73, %74, %cst_27 {dimension_numbers = #tpu.dot_dimension_numbers<[1], [0], [0], [1], [0, 0, 1, 1], [], []>} : vector<8x8xbf16>, vector<8x16xbf16>, vector<8x16xf32> -> vector<8x16xf32>
    %76 = tpu.concatenate %54, %75 in 1 : vector<8x16xf32>, vector<8x16xf32> -> vector<8x32xf32>
    %77 = arith.truncf %76 : vector<8x32xf32> to vector<8x32xbf16>
    %c0_28 = arith.constant 0 : index
    %c0_29 = arith.constant 0 : index
    %c0_30 = arith.constant 0 : index
    %78 = vector.load %arg7[%c0_28, %c0_29, %c0_30] : memref<2x32x32xbf16, #tpu.memory_space<vmem>>, vector<1x32x32xbf16>
    %79 = vector.shape_cast %78 : vector<1x32x32xbf16> to vector<32x32xbf16>
    %cst_31 = arith.constant dense<0.000000e+00> : vector<8x32xf32>
    %80 = tpu.matmul %77, %79, %cst_31 {dimension_numbers = #tpu.dot_dimension_numbers<[1], [0], [0], [1], [0, 0, 1, 1], [], []>} : vector<8x32xbf16>, vector<32x32xbf16>, vector<8x32xf32> -> vector<8x32xf32>
    %c0_32 = arith.constant 0 : index
    %c0_33 = arith.constant 0 : index
    %c0_34 = arith.constant 0 : index
    %81 = vector.load %arg8[%c0_32, %c0_33, %c0_34] : memref<2x1x32xf32, #tpu.memory_space<vmem>>, vector<1x1x32xf32>
    %82 = vector.shape_cast %81 : vector<1x1x32xf32> to vector<1x32xf32>
    %83 = vector.broadcast %82 : vector<1x32xf32> to vector<8x32xf32>
    %84 = arith.addf %80, %83 : vector<8x32xf32>
    %85 = arith.addf %84, %23 : vector<8x32xf32>
    %c0_35 = arith.constant 0 : index
    %c0_36 = arith.constant 0 : index
    %c0_37 = arith.constant 0 : index
    %86 = vector.load %arg9[%c0_35, %c0_36, %c0_37] : memref<2x1x32xf32, #tpu.memory_space<vmem>>, vector<1x1x32xf32>
    %87 = vector.shape_cast %86 : vector<1x1x32xf32> to vector<1x32xf32>
    %c0_38 = arith.constant 0 : index
    %c0_39 = arith.constant 0 : index
    %c0_40 = arith.constant 0 : index
    %88 = vector.load %arg10[%c0_38, %c0_39, %c0_40] : memref<2x1x32xf32, #tpu.memory_space<vmem>>, vector<1x1x32xf32>
    %89 = vector.shape_cast %88 : vector<1x1x32xf32> to vector<1x32xf32>
    %cst_41 = arith.constant dense<0.000000e+00> : vector<8xf32>
    %90 = vector.multi_reduction <add>, %85, %cst_41 [1] : vector<8x32xf32> to vector<8xf32>
    %91 = vector.shape_cast %90 : vector<8xf32> to vector<8x1xf32>
    %cst_42 = arith.constant 3.200000e+01 : f32
    %92 = vector.broadcast %cst_42 : f32 to vector<8x1xf32>
    %93 = arith.divf %91, %92 : vector<8x1xf32>
    %94 = vector.broadcast %93 : vector<8x1xf32> to vector<8x32xf32>
    %95 = arith.subf %85, %94 : vector<8x32xf32>
    %96 = arith.mulf %95, %95 : vector<8x32xf32>
    %cst_43 = arith.constant dense<0.000000e+00> : vector<8xf32>
    %97 = vector.multi_reduction <add>, %96, %cst_43 [1] : vector<8x32xf32> to vector<8xf32>
    %98 = vector.shape_cast %97 : vector<8xf32> to vector<8x1xf32>
    %cst_44 = arith.constant 3.200000e+01 : f32
    %99 = vector.broadcast %cst_44 : f32 to vector<8x1xf32>
    %100 = arith.divf %98, %99 : vector<8x1xf32>
    %cst_45 = arith.constant 9.99999996E-13 : f32
    %101 = vector.broadcast %cst_45 : f32 to vector<8x1xf32>
    %102 = arith.addf %100, %101 : vector<8x1xf32>
    %103 = math.rsqrt %102 : vector<8x1xf32>
    %104 = vector.broadcast %103 : vector<8x1xf32> to vector<8x32xf32>
    %105 = arith.mulf %95, %104 : vector<8x32xf32>
    %106 = vector.broadcast %87 : vector<1x32xf32> to vector<8x32xf32>
    %107 = arith.mulf %105, %106 : vector<8x32xf32>
    %108 = vector.broadcast %89 : vector<1x32xf32> to vector<8x32xf32>
    %109 = arith.addf %107, %108 : vector<8x32xf32>
    %110 = arith.truncf %109 : vector<8x32xf32> to vector<8x32xbf16>
    %c0_46 = arith.constant 0 : index
    %c0_47 = arith.constant 0 : index
    %c0_48 = arith.constant 0 : index
    %111 = vector.load %arg11[%c0_46, %c0_47, %c0_48] : memref<2x32x64xbf16, #tpu.memory_space<vmem>>, vector<1x32x64xbf16>
    %112 = vector.shape_cast %111 : vector<1x32x64xbf16> to vector<32x64xbf16>
    %cst_49 = arith.constant dense<0.000000e+00> : vector<8x64xf32>
    %113 = tpu.matmul %110, %112, %cst_49 {dimension_numbers = #tpu.dot_dimension_numbers<[1], [0], [0], [1], [0, 0, 1, 1], [], []>} : vector<8x32xbf16>, vector<32x64xbf16>, vector<8x64xf32> -> vector<8x64xf32>
    %c0_50 = arith.constant 0 : index
    %c0_51 = arith.constant 0 : index
    %c0_52 = arith.constant 0 : index
    %114 = vector.load %arg12[%c0_50, %c0_51, %c0_52] : memref<2x1x64xf32, #tpu.memory_space<vmem>>, vector<1x1x64xf32>
    %115 = vector.shape_cast %114 : vector<1x1x64xf32> to vector<1x64xf32>
    %116 = vector.broadcast %115 : vector<1x64xf32> to vector<8x64xf32>
    %117 = arith.addf %113, %116 : vector<8x64xf32>
    %cst_53 = arith.constant 5.000000e-01 : f32
    %118 = vector.broadcast %cst_53 : f32 to vector<8x64xf32>
    %119 = arith.mulf %118, %117 : vector<8x64xf32>
    %cst_54 = arith.constant 4.471500e-02 : f32
    %120 = vector.broadcast %cst_54 : f32 to vector<8x64xf32>
    %121 = arith.mulf %120, %117 : vector<8x64xf32>
    %122 = arith.mulf %121, %117 : vector<8x64xf32>
    %123 = arith.mulf %122, %117 : vector<8x64xf32>
    %124 = arith.addf %117, %123 : vector<8x64xf32>
    %cst_55 = arith.constant 0.797884583 : f32
    %125 = vector.broadcast %cst_55 : f32 to vector<8x64xf32>
    %126 = arith.mulf %125, %124 : vector<8x64xf32>
    %127 = math.tanh %126 : vector<8x64xf32>
    %cst_56 = arith.constant 1.000000e+00 : f32
    %128 = vector.broadcast %cst_56 : f32 to vector<8x64xf32>
    %129 = arith.addf %128, %127 : vector<8x64xf32>
    %130 = arith.mulf %119, %129 : vector<8x64xf32>
    %131 = arith.truncf %130 : vector<8x64xf32> to vector<8x64xbf16>
    %c0_57 = arith.constant 0 : index
    %c0_58 = arith.constant 0 : index
    %c0_59 = arith.constant 0 : index
    %132 = vector.load %arg13[%c0_57, %c0_58, %c0_59] : memref<2x64x32xbf16, #tpu.memory_space<vmem>>, vector<1x64x32xbf16>
    %133 = vector.shape_cast %132 : vector<1x64x32xbf16> to vector<64x32xbf16>
    %cst_60 = arith.constant dense<0.000000e+00> : vector<8x32xf32>
    %134 = tpu.matmul %131, %133, %cst_60 {dimension_numbers = #tpu.dot_dimension_numbers<[1], [0], [0], [1], [0, 0, 1, 1], [], []>} : vector<8x64xbf16>, vector<64x32xbf16>, vector<8x32xf32> -> vector<8x32xf32>
    %c0_61 = arith.constant 0 : index
    %c0_62 = arith.constant 0 : index
    %c0_63 = arith.constant 0 : index
    %135 = vector.load %arg14[%c0_61, %c0_62, %c0_63] : memref<2x1x32xf32, #tpu.memory_space<vmem>>, vector<1x1x32xf32>
    %136 = vector.shape_cast %135 : vector<1x1x32xf32> to vector<1x32xf32>
    %137 = vector.broadcast %136 : vector<1x32xf32> to vector<8x32xf32>
    %138 = arith.addf %134, %137 : vector<8x32xf32>
    %139 = arith.addf %138, %109 : vector<8x32xf32>
    %c0_64 = arith.constant 0 : index
    %c0_65 = arith.constant 0 : index
    %c0_66 = arith.constant 0 : index
    %140 = vector.load %arg15[%c0_64, %c0_65, %c0_66] : memref<2x1x32xf32, #tpu.memory_space<vmem>>, vector<1x1x32xf32>
    %141 = vector.shape_cast %140 : vector<1x1x32xf32> to vector<1x32xf32>
    %c0_67 = arith.constant 0 : index
    %c0_68 = arith.constant 0 : index
    %c0_69 = arith.constant 0 : index
    %142 = vector.load %arg16[%c0_67, %c0_68, %c0_69] : memref<2x1x32xf32, #tpu.memory_space<vmem>>, vector<1x1x32xf32>
    %143 = vector.shape_cast %142 : vector<1x1x32xf32> to vector<1x32xf32>
    %cst_70 = arith.constant dense<0.000000e+00> : vector<8xf32>
    %144 = vector.multi_reduction <add>, %139, %cst_70 [1] : vector<8x32xf32> to vector<8xf32>
    %145 = vector.shape_cast %144 : vector<8xf32> to vector<8x1xf32>
    %cst_71 = arith.constant 3.200000e+01 : f32
    %146 = vector.broadcast %cst_71 : f32 to vector<8x1xf32>
    %147 = arith.divf %145, %146 : vector<8x1xf32>
    %148 = vector.broadcast %147 : vector<8x1xf32> to vector<8x32xf32>
    %149 = arith.subf %139, %148 : vector<8x32xf32>
    %150 = arith.mulf %149, %149 : vector<8x32xf32>
    %cst_72 = arith.constant dense<0.000000e+00> : vector<8xf32>
    %151 = vector.multi_reduction <add>, %150, %cst_72 [1] : vector<8x32xf32> to vector<8xf32>
    %152 = vector.shape_cast %151 : vector<8xf32> to vector<8x1xf32>
    %cst_73 = arith.constant 3.200000e+01 : f32
    %153 = vector.broadcast %cst_73 : f32 to vector<8x1xf32>
    %154 = arith.divf %152, %153 : vector<8x1xf32>
    %cst_74 = arith.constant 9.99999996E-13 : f32
    %155 = vector.broadcast %cst_74 : f32 to vector<8x1xf32>
    %156 = arith.addf %154, %155 : vector<8x1xf32>
    %157 = math.rsqrt %156 : vector<8x1xf32>
    %158 = vector.broadcast %157 : vector<8x1xf32> to vector<8x32xf32>
    %159 = arith.mulf %149, %158 : vector<8x32xf32>
    %160 = vector.broadcast %141 : vector<1x32xf32> to vector<8x32xf32>
    %161 = arith.mulf %159, %160 : vector<8x32xf32>
    %162 = vector.broadcast %143 : vector<1x32xf32> to vector<8x32xf32>
    %163 = arith.addf %161, %162 : vector<8x32xf32>
    %164 = arith.truncf %163 : vector<8x32xf32> to vector<8x32xbf16>
    %c1 = arith.constant 1 : index
    %c0_75 = arith.constant 0 : index
    %c0_76 = arith.constant 0 : index
    %165 = vector.load %arg5[%c1, %c0_75, %c0_76] : memref<2x32x96xbf16, #tpu.memory_space<vmem>>, vector<1x32x96xbf16>
    %166 = vector.shape_cast %165 : vector<1x32x96xbf16> to vector<32x96xbf16>
    %cst_77 = arith.constant dense<0.000000e+00> : vector<8x96xf32>
    %167 = tpu.matmul %164, %166, %cst_77 {dimension_numbers = #tpu.dot_dimension_numbers<[1], [0], [0], [1], [0, 0, 1, 1], [], []>} : vector<8x32xbf16>, vector<32x96xbf16>, vector<8x96xf32> -> vector<8x96xf32>
    %c1_78 = arith.constant 1 : index
    %c0_79 = arith.constant 0 : index
    %c0_80 = arith.constant 0 : index
    %168 = vector.load %arg6[%c1_78, %c0_79, %c0_80] : memref<2x1x96xf32, #tpu.memory_space<vmem>>, vector<1x1x96xf32>
    %169 = vector.shape_cast %168 : vector<1x1x96xf32> to vector<1x96xf32>
    %170 = vector.broadcast %169 : vector<1x96xf32> to vector<8x96xf32>
    %171 = arith.addf %167, %170 : vector<8x96xf32>
    %172 = vector.extract_strided_slice %171 {offsets = [0, 0], sizes = [8, 16], strides = [1, 1]} : vector<8x96xf32> to vector<8x16xf32>
    %173 = vector.extract_strided_slice %171 {offsets = [0, 32], sizes = [8, 16], strides = [1, 1]} : vector<8x96xf32> to vector<8x16xf32>
    %174 = vector.extract_strided_slice %171 {offsets = [0, 64], sizes = [8, 16], strides = [1, 1]} : vector<8x96xf32> to vector<8x16xf32>
    %175 = arith.truncf %172 : vector<8x16xf32> to vector<8x16xbf16>
    %176 = arith.truncf %173 : vector<8x16xf32> to vector<8x16xbf16>
    %cst_81 = arith.constant dense<0.000000e+00> : vector<8x8xf32>
    %177 = tpu.matmul %175, %176, %cst_81 {dimension_numbers = #tpu.dot_dimension_numbers<[1], [1], [0], [0], [0, 0, 1, 0], [], []>} : vector<8x16xbf16>, vector<8x16xbf16>, vector<8x8xf32> -> vector<8x8xf32>
    %178 = vector.broadcast %25 : vector<1x8xf32> to vector<8x8xf32>
    %179 = arith.addf %177, %178 : vector<8x8xf32>
    %cst_82 = arith.constant dense<0xFF800000> : vector<8xf32>
    %180 = vector.multi_reduction <maximumf>, %179, %cst_82 [1] : vector<8x8xf32> to vector<8xf32>
    %181 = vector.shape_cast %180 : vector<8xf32> to vector<8x1xf32>
    %182 = vector.broadcast %181 : vector<8x1xf32> to vector<8x8xf32>
    %183 = arith.subf %179, %182 : vector<8x8xf32>
    %184 = math.exp %183 : vector<8x8xf32>
    %cst_83 = arith.constant dense<0.000000e+00> : vector<8xf32>
    %185 = vector.multi_reduction <add>, %184, %cst_83 [1] : vector<8x8xf32> to vector<8xf32>
    %186 = vector.shape_cast %185 : vector<8xf32> to vector<8x1xf32>
    %187 = tpu.reciprocal %186 {approx = true} : vector<8x1xf32> -> vector<8x1xf32>
    %188 = vector.broadcast %187 : vector<8x1xf32> to vector<8x8xf32>
    %189 = arith.mulf %184, %188 : vector<8x8xf32>
    %190 = arith.truncf %189 : vector<8x8xf32> to vector<8x8xbf16>
    %191 = arith.truncf %174 : vector<8x16xf32> to vector<8x16xbf16>
    %cst_84 = arith.constant dense<0.000000e+00> : vector<8x16xf32>
    %192 = tpu.matmul %190, %191, %cst_84 {dimension_numbers = #tpu.dot_dimension_numbers<[1], [0], [0], [1], [0, 0, 1, 1], [], []>} : vector<8x8xbf16>, vector<8x16xbf16>, vector<8x16xf32> -> vector<8x16xf32>
    %193 = vector.extract_strided_slice %171 {offsets = [0, 16], sizes = [8, 16], strides = [1, 1]} : vector<8x96xf32> to vector<8x16xf32>
    %194 = vector.extract_strided_slice %171 {offsets = [0, 48], sizes = [8, 16], strides = [1, 1]} : vector<8x96xf32> to vector<8x16xf32>
    %195 = vector.extract_strided_slice %171 {offsets = [0, 80], sizes = [8, 16], strides = [1, 1]} : vector<8x96xf32> to vector<8x16xf32>
    %196 = arith.truncf %193 : vector<8x16xf32> to vector<8x16xbf16>
    %197 = arith.truncf %194 : vector<8x16xf32> to vector<8x16xbf16>
    %cst_85 = arith.constant dense<0.000000e+00> : vector<8x8xf32>
    %198 = tpu.matmul %196, %197, %cst_85 {dimension_numbers = #tpu.dot_dimension_numbers<[1], [1], [0], [0], [0, 0, 1, 0], [], []>} : vector<8x16xbf16>, vector<8x16xbf16>, vector<8x8xf32> -> vector<8x8xf32>
    %199 = vector.broadcast %25 : vector<1x8xf32> to vector<8x8xf32>
    %200 = arith.addf %198, %199 : vector<8x8xf32>
    %cst_86 = arith.constant dense<0xFF800000> : vector<8xf32>
    %201 = vector.multi_reduction <maximumf>, %200, %cst_86 [1] : vector<8x8xf32> to vector<8xf32>
    %202 = vector.shape_cast %201 : vector<8xf32> to vector<8x1xf32>
    %203 = vector.broadcast %202 : vector<8x1xf32> to vector<8x8xf32>
    %204 = arith.subf %200, %203 : vector<8x8xf32>
    %205 = math.exp %204 : vector<8x8xf32>
    %cst_87 = arith.constant dense<0.000000e+00> : vector<8xf32>
    %206 = vector.multi_reduction <add>, %205, %cst_87 [1] : vector<8x8xf32> to vector<8xf32>
    %207 = vector.shape_cast %206 : vector<8xf32> to vector<8x1xf32>
    %208 = tpu.reciprocal %207 {approx = true} : vector<8x1xf32> -> vector<8x1xf32>
    %209 = vector.broadcast %208 : vector<8x1xf32> to vector<8x8xf32>
    %210 = arith.mulf %205, %209 : vector<8x8xf32>
    %211 = arith.truncf %210 : vector<8x8xf32> to vector<8x8xbf16>
    %212 = arith.truncf %195 : vector<8x16xf32> to vector<8x16xbf16>
    %cst_88 = arith.constant dense<0.000000e+00> : vector<8x16xf32>
    %213 = tpu.matmul %211, %212, %cst_88 {dimension_numbers = #tpu.dot_dimension_numbers<[1], [0], [0], [1], [0, 0, 1, 1], [], []>} : vector<8x8xbf16>, vector<8x16xbf16>, vector<8x16xf32> -> vector<8x16xf32>
    %214 = tpu.concatenate %192, %213 in 1 : vector<8x16xf32>, vector<8x16xf32> -> vector<8x32xf32>
    %215 = arith.truncf %214 : vector<8x32xf32> to vector<8x32xbf16>
    %c1_89 = arith.constant 1 : index
    %c0_90 = arith.constant 0 : index
    %c0_91 = arith.constant 0 : index
    %216 = vector.load %arg7[%c1_89, %c0_90, %c0_91] : memref<2x32x32xbf16, #tpu.memory_space<vmem>>, vector<1x32x32xbf16>
    %217 = vector.shape_cast %216 : vector<1x32x32xbf16> to vector<32x32xbf16>
    %cst_92 = arith.constant dense<0.000000e+00> : vector<8x32xf32>
    %218 = tpu.matmul %215, %217, %cst_92 {dimension_numbers = #tpu.dot_dimension_numbers<[1], [0], [0], [1], [0, 0, 1, 1], [], []>} : vector<8x32xbf16>, vector<32x32xbf16>, vector<8x32xf32> -> vector<8x32xf32>
    %c1_93 = arith.constant 1 : index
    %c0_94 = arith.constant 0 : index
    %c0_95 = arith.constant 0 : index
    %219 = vector.load %arg8[%c1_93, %c0_94, %c0_95] : memref<2x1x32xf32, #tpu.memory_space<vmem>>, vector<1x1x32xf32>
    %220 = vector.shape_cast %219 : vector<1x1x32xf32> to vector<1x32xf32>
    %221 = vector.broadcast %220 : vector<1x32xf32> to vector<8x32xf32>
    %222 = arith.addf %218, %221 : vector<8x32xf32>
    %223 = arith.addf %222, %163 : vector<8x32xf32>
    %c1_96 = arith.constant 1 : index
    %c0_97 = arith.constant 0 : index
    %c0_98 = arith.constant 0 : index
    %224 = vector.load %arg9[%c1_96, %c0_97, %c0_98] : memref<2x1x32xf32, #tpu.memory_space<vmem>>, vector<1x1x32xf32>
    %225 = vector.shape_cast %224 : vector<1x1x32xf32> to vector<1x32xf32>
    %c1_99 = arith.constant 1 : index
    %c0_100 = arith.constant 0 : index
    %c0_101 = arith.constant 0 : index
    %226 = vector.load %arg10[%c1_99, %c0_100, %c0_101] : memref<2x1x32xf32, #tpu.memory_space<vmem>>, vector<1x1x32xf32>
    %227 = vector.shape_cast %226 : vector<1x1x32xf32> to vector<1x32xf32>
    %cst_102 = arith.constant dense<0.000000e+00> : vector<8xf32>
    %228 = vector.multi_reduction <add>, %223, %cst_102 [1] : vector<8x32xf32> to vector<8xf32>
    %229 = vector.shape_cast %228 : vector<8xf32> to vector<8x1xf32>
    %cst_103 = arith.constant 3.200000e+01 : f32
    %230 = vector.broadcast %cst_103 : f32 to vector<8x1xf32>
    %231 = arith.divf %229, %230 : vector<8x1xf32>
    %232 = vector.broadcast %231 : vector<8x1xf32> to vector<8x32xf32>
    %233 = arith.subf %223, %232 : vector<8x32xf32>
    %234 = arith.mulf %233, %233 : vector<8x32xf32>
    %cst_104 = arith.constant dense<0.000000e+00> : vector<8xf32>
    %235 = vector.multi_reduction <add>, %234, %cst_104 [1] : vector<8x32xf32> to vector<8xf32>
    %236 = vector.shape_cast %235 : vector<8xf32> to vector<8x1xf32>
    %cst_105 = arith.constant 3.200000e+01 : f32
    %237 = vector.broadcast %cst_105 : f32 to vector<8x1xf32>
    %238 = arith.divf %236, %237 : vector<8x1xf32>
    %cst_106 = arith.constant 9.99999996E-13 : f32
    %239 = vector.broadcast %cst_106 : f32 to vector<8x1xf32>
    %240 = arith.addf %238, %239 : vector<8x1xf32>
    %241 = math.rsqrt %240 : vector<8x1xf32>
    %242 = vector.broadcast %241 : vector<8x1xf32> to vector<8x32xf32>
    %243 = arith.mulf %233, %242 : vector<8x32xf32>
    %244 = vector.broadcast %225 : vector<1x32xf32> to vector<8x32xf32>
    %245 = arith.mulf %243, %244 : vector<8x32xf32>
    %246 = vector.broadcast %227 : vector<1x32xf32> to vector<8x32xf32>
    %247 = arith.addf %245, %246 : vector<8x32xf32>
    %248 = arith.truncf %247 : vector<8x32xf32> to vector<8x32xbf16>
    %c1_107 = arith.constant 1 : index
    %c0_108 = arith.constant 0 : index
    %c0_109 = arith.constant 0 : index
    %249 = vector.load %arg11[%c1_107, %c0_108, %c0_109] : memref<2x32x64xbf16, #tpu.memory_space<vmem>>, vector<1x32x64xbf16>
    %250 = vector.shape_cast %249 : vector<1x32x64xbf16> to vector<32x64xbf16>
    %cst_110 = arith.constant dense<0.000000e+00> : vector<8x64xf32>
    %251 = tpu.matmul %248, %250, %cst_110 {dimension_numbers = #tpu.dot_dimension_numbers<[1], [0], [0], [1], [0, 0, 1, 1], [], []>} : vector<8x32xbf16>, vector<32x64xbf16>, vector<8x64xf32> -> vector<8x64xf32>
    %c1_111 = arith.constant 1 : index
    %c0_112 = arith.constant 0 : index
    %c0_113 = arith.constant 0 : index
    %252 = vector.load %arg12[%c1_111, %c0_112, %c0_113] : memref<2x1x64xf32, #tpu.memory_space<vmem>>, vector<1x1x64xf32>
    %253 = vector.shape_cast %252 : vector<1x1x64xf32> to vector<1x64xf32>
    %254 = vector.broadcast %253 : vector<1x64xf32> to vector<8x64xf32>
    %255 = arith.addf %251, %254 : vector<8x64xf32>
    %cst_114 = arith.constant 5.000000e-01 : f32
    %256 = vector.broadcast %cst_114 : f32 to vector<8x64xf32>
    %257 = arith.mulf %256, %255 : vector<8x64xf32>
    %cst_115 = arith.constant 4.471500e-02 : f32
    %258 = vector.broadcast %cst_115 : f32 to vector<8x64xf32>
    %259 = arith.mulf %258, %255 : vector<8x64xf32>
    %260 = arith.mulf %259, %255 : vector<8x64xf32>
    %261 = arith.mulf %260, %255 : vector<8x64xf32>
    %262 = arith.addf %255, %261 : vector<8x64xf32>
    %cst_116 = arith.constant 0.797884583 : f32
    %263 = vector.broadcast %cst_116 : f32 to vector<8x64xf32>
    %264 = arith.mulf %263, %262 : vector<8x64xf32>
    %265 = math.tanh %264 : vector<8x64xf32>
    %cst_117 = arith.constant 1.000000e+00 : f32
    %266 = vector.broadcast %cst_117 : f32 to vector<8x64xf32>
    %267 = arith.addf %266, %265 : vector<8x64xf32>
    %268 = arith.mulf %257, %267 : vector<8x64xf32>
    %269 = arith.truncf %268 : vector<8x64xf32> to vector<8x64xbf16>
    %c1_118 = arith.constant 1 : index
    %c0_119 = arith.constant 0 : index
    %c0_120 = arith.constant 0 : index
    %270 = vector.load %arg13[%c1_118, %c0_119, %c0_120] : memref<2x64x32xbf16, #tpu.memory_space<vmem>>, vector<1x64x32xbf16>
    %271 = vector.shape_cast %270 : vector<1x64x32xbf16> to vector<64x32xbf16>
    %cst_121 = arith.constant dense<0.000000e+00> : vector<8x32xf32>
    %272 = tpu.matmul %269, %271, %cst_121 {dimension_numbers = #tpu.dot_dimension_numbers<[1], [0], [0], [1], [0, 0, 1, 1], [], []>} : vector<8x64xbf16>, vector<64x32xbf16>, vector<8x32xf32> -> vector<8x32xf32>
    %c1_122 = arith.constant 1 : index
    %c0_123 = arith.constant 0 : index
    %c0_124 = arith.constant 0 : index
    %273 = vector.load %arg14[%c1_122, %c0_123, %c0_124] : memref<2x1x32xf32, #tpu.memory_space<vmem>>, vector<1x1x32xf32>
    %274 = vector.shape_cast %273 : vector<1x1x32xf32> to vector<1x32xf32>
    %275 = vector.broadcast %274 : vector<1x32xf32> to vector<8x32xf32>
    %276 = arith.addf %272, %275 : vector<8x32xf32>
    %277 = arith.addf %276, %247 : vector<8x32xf32>
    %c1_125 = arith.constant 1 : index
    %c0_126 = arith.constant 0 : index
    %c0_127 = arith.constant 0 : index
    %278 = vector.load %arg15[%c1_125, %c0_126, %c0_127] : memref<2x1x32xf32, #tpu.memory_space<vmem>>, vector<1x1x32xf32>
    %279 = vector.shape_cast %278 : vector<1x1x32xf32> to vector<1x32xf32>
    %c1_128 = arith.constant 1 : index
    %c0_129 = arith.constant 0 : index
    %c0_130 = arith.constant 0 : index
    %280 = vector.load %arg16[%c1_128, %c0_129, %c0_130] : memref<2x1x32xf32, #tpu.memory_space<vmem>>, vector<1x1x32xf32>
    %281 = vector.shape_cast %280 : vector<1x1x32xf32> to vector<1x32xf32>
    %cst_131 = arith.constant dense<0.000000e+00> : vector<8xf32>
    %282 = vector.multi_reduction <add>, %277, %cst_131 [1] : vector<8x32xf32> to vector<8xf32>
    %283 = vector.shape_cast %282 : vector<8xf32> to vector<8x1xf32>
    %cst_132 = arith.constant 3.200000e+01 : f32
    %284 = vector.broadcast %cst_132 : f32 to vector<8x1xf32>
    %285 = arith.divf %283, %284 : vector<8x1xf32>
    %286 = vector.broadcast %285 : vector<8x1xf32> to vector<8x32xf32>
    %287 = arith.subf %277, %286 : vector<8x32xf32>
    %288 = arith.mulf %287, %287 : vector<8x32xf32>
    %cst_133 = arith.constant dense<0.000000e+00> : vector<8xf32>
    %289 = vector.multi_reduction <add>, %288, %cst_133 [1] : vector<8x32xf32> to vector<8xf32>
    %290 = vector.shape_cast %289 : vector<8xf32> to vector<8x1xf32>
    %cst_134 = arith.constant 3.200000e+01 : f32
    %291 = vector.broadcast %cst_134 : f32 to vector<8x1xf32>
    %292 = arith.divf %290, %291 : vector<8x1xf32>
    %cst_135 = arith.constant 9.99999996E-13 : f32
    %293 = vector.broadcast %cst_135 : f32 to vector<8x1xf32>
    %294 = arith.addf %292, %293 : vector<8x1xf32>
    %295 = math.rsqrt %294 : vector<8x1xf32>
    %296 = vector.broadcast %295 : vector<8x1xf32> to vector<8x32xf32>
    %297 = arith.mulf %287, %296 : vector<8x32xf32>
    %298 = vector.broadcast %279 : vector<1x32xf32> to vector<8x32xf32>
    %299 = arith.mulf %297, %298 : vector<8x32xf32>
    %300 = vector.broadcast %281 : vector<1x32xf32> to vector<8x32xf32>
    %301 = arith.addf %299, %300 : vector<8x32xf32>
    %302 = vector.extract_strided_slice %301 {offsets = [0, 0], sizes = [1, 32], strides = [1, 1]} : vector<8x32xf32> to vector<1x32xf32>
    %303 = arith.truncf %302 : vector<1x32xf32> to vector<1x32xbf16>
    %c0_136 = arith.constant 0 : index
    %c0_137 = arith.constant 0 : index
    %304 = vector.load %arg17[%c0_136, %c0_137] : memref<32x8xbf16, #tpu.memory_space<vmem>>, vector<32x8xbf16>
    %cst_138 = arith.constant dense<0.000000e+00> : vector<1x8xf32>
    %305 = tpu.matmul %303, %304, %cst_138 {dimension_numbers = #tpu.dot_dimension_numbers<[1], [0], [0], [1], [0, 0, 1, 1], [], []>} : vector<1x32xbf16>, vector<32x8xbf16>, vector<1x8xf32> -> vector<1x8xf32>
    %c0_139 = arith.constant 0 : index
    %c0_140 = arith.constant 0 : index
    %306 = vector.load %arg18[%c0_139, %c0_140] : memref<1x8xf32, #tpu.memory_space<vmem>>, vector<1x8xf32>
    %307 = arith.addf %305, %306 : vector<1x8xf32>
    %c0_141 = arith.constant 0 : index
    %c0_142 = arith.constant 0 : index
    %c0_143 = arith.constant 0 : index
    %308 = vector.load %arg19[%c0_141, %c0_142, %c0_143] : memref<1x1x8xf32, #tpu.memory_space<vmem>>, vector<1x1x8xf32>
    %309 = vector.shape_cast %308 : vector<1x1x8xf32> to vector<1x8xf32>
    %310 = vector.shape_cast %307 : vector<1x8xf32> to vector<1x1x8xf32>
    tpu.vector_store %arg19[%c0_141, %c0_142, %c0_143], %310 {strides = array<i32>} : memref<1x1x8xf32, #tpu.memory_space<vmem>>, vector<1x1x8xf32>,
    return
  }
  func.func @transform_0(%arg0: i32) -> (i32, i32, i32) {
    %c0_i32 = arith.constant 0 : i32
    %c0_i32_0 = arith.constant 0 : i32
    %c0_i32_1 = arith.constant 0 : i32
    return %arg0, %c0_i32, %c0_i32_0 : i32, i32, i32
  }
  func.func @transform_1(%arg0: i32) -> (i32, i32, i32) {
    %c0_i32 = arith.constant 0 : i32
    %c0_i32_0 = arith.constant 0 : i32
    %c0_i32_1 = arith.constant 0 : i32
    return %arg0, %c0_i32, %c0_i32_0 : i32, i32, i32
  }
  func.func @transform_2(%arg0: i32) -> (i32, i32) {
    %c0_i32 = arith.constant 0 : i32
    %c0_i32_0 = arith.constant 0 : i32
    %c0_i32_1 = arith.constant 0 : i32
    return %c0_i32, %c0_i32_0 : i32, i32
  }
  func.func @transform_3(%arg0: i32) -> (i32, i32) {
    %c0_i32 = arith.constant 0 : i32
    %c0_i32_0 = arith.constant 0 : i32
    %c0_i32_1 = arith.constant 0 : i32
    return %c0_i32, %c0_i32_0 : i32, i32
  }
  func.func @transform_4(%arg0: i32) -> (i32, i32, i32) {
    %c0_i32 = arith.constant 0 : i32
    %c0_i32_0 = arith.constant 0 : i32
    %c0_i32_1 = arith.constant 0 : i32
    %c0_i32_2 = arith.constant 0 : i32
    return %c0_i32, %c0_i32_0, %c0_i32_1 : i32, i32, i32
  }
  func.func @transform_5(%arg0: i32) -> (i32, i32, i32) {
    %c0_i32 = arith.constant 0 : i32
    %c0_i32_0 = arith.constant 0 : i32
    %c0_i32_1 = arith.constant 0 : i32
    %c0_i32_2 = arith.constant 0 : i32
    return %c0_i32, %c0_i32_0, %c0_i32_1 : i32, i32, i32
  }
  func.func @transform_6(%arg0: i32) -> (i32, i32, i32) {
    %c0_i32 = arith.constant 0 : i32
    %c0_i32_0 = arith.constant 0 : i32
    %c0_i32_1 = arith.constant 0 : i32
    %c0_i32_2 = arith.constant 0 : i32
    return %c0_i32, %c0_i32_0, %c0_i32_1 : i32, i32, i32
  }
  func.func @transform_7(%arg0: i32) -> (i32, i32, i32) {
    %c0_i32 = arith.constant 0 : i32
    %c0_i32_0 = arith.constant 0 : i32
    %c0_i32_1 = arith.constant 0 : i32
    %c0_i32_2 = arith.constant 0 : i32
    return %c0_i32, %c0_i32_0, %c0_i32_1 : i32, i32, i32
  }
  func.func @transform_8(%arg0: i32) -> (i32, i32, i32) {
    %c0_i32 = arith.constant 0 : i32
    %c0_i32_0 = arith.constant 0 : i32
    %c0_i32_1 = arith.constant 0 : i32
    %c0_i32_2 = arith.constant 0 : i32
    return %c0_i32, %c0_i32_0, %c0_i32_1 : i32, i32, i32
  }
  func.func @transform_9(%arg0: i32) -> (i32, i32, i32) {
    %c0_i32 = arith.constant 0 : i32
    %c0_i32_0 = arith.constant 0 : i32
    %c0_i32_1 = arith.constant 0 : i32
    %c0_i32_2 = arith.constant 0 : i32
    return %c0_i32, %c0_i32_0, %c0_i32_1 : i32, i32, i32
  }
  func.func @transform_10(%arg0: i32) -> (i32, i32, i32) {
    %c0_i32 = arith.constant 0 : i32
    %c0_i32_0 = arith.constant 0 : i32
    %c0_i32_1 = arith.constant 0 : i32
    %c0_i32_2 = arith.constant 0 : i32
    return %c0_i32, %c0_i32_0, %c0_i32_1 : i32, i32, i32
  }
  func.func @transform_11(%arg0: i32) -> (i32, i32, i32) {
    %c0_i32 = arith.constant 0 : i32
    %c0_i32_0 = arith.constant 0 : i32
    %c0_i32_1 = arith.constant 0 : i32
    %c0_i32_2 = arith.constant 0 : i32
    return %c0_i32, %c0_i32_0, %c0_i32_1 : i32, i32, i32
  }
  func.func @transform_12(%arg0: i32) -> (i32, i32, i32) {
    %c0_i32 = arith.constant 0 : i32
    %c0_i32_0 = arith.constant 0 : i32
    %c0_i32_1 = arith.constant 0 : i32
    %c0_i32_2 = arith.constant 0 : i32
    return %c0_i32, %c0_i32_0, %c0_i32_1 : i32, i32, i32
  }
  func.func @transform_13(%arg0: i32) -> (i32, i32, i32) {
    %c0_i32 = arith.constant 0 : i32
    %c0_i32_0 = arith.constant 0 : i32
    %c0_i32_1 = arith.constant 0 : i32
    %c0_i32_2 = arith.constant 0 : i32
    return %c0_i32, %c0_i32_0, %c0_i32_1 : i32, i32, i32
  }
  func.func @transform_14(%arg0: i32) -> (i32, i32, i32) {
    %c0_i32 = arith.constant 0 : i32
    %c0_i32_0 = arith.constant 0 : i32
    %c0_i32_1 = arith.constant 0 : i32
    %c0_i32_2 = arith.constant 0 : i32
    return %c0_i32, %c0_i32_0, %c0_i32_1 : i32, i32, i32
  }
  func.func @transform_15(%arg0: i32) -> (i32, i32, i32) {
    %c0_i32 = arith.constant 0 : i32
    %c0_i32_0 = arith.constant 0 : i32
    %c0_i32_1 = arith.constant 0 : i32
    %c0_i32_2 = arith.constant 0 : i32
    return %c0_i32, %c0_i32_0, %c0_i32_1 : i32, i32, i32
  }
  func.func @transform_16(%arg0: i32) -> (i32, i32) {
    %c0_i32 = arith.constant 0 : i32
    %c0_i32_0 = arith.constant 0 : i32
    %c0_i32_1 = arith.constant 0 : i32
    return %c0_i32, %c0_i32_0 : i32, i32
  }
  func.func @transform_17(%arg0: i32) -> (i32, i32) {
    %c0_i32 = arith.constant 0 : i32
    %c0_i32_0 = arith.constant 0 : i32
    %c0_i32_1 = arith.constant 0 : i32
    return %c0_i32, %c0_i32_0 : i32, i32
  }
  func.func @transform_18(%arg0: i32) -> (i32, i32, i32) {
    %c0_i32 = arith.constant 0 : i32
    %c0_i32_0 = arith.constant 0 : i32
    %c0_i32_1 = arith.constant 0 : i32
    return %arg0, %c0_i32, %c0_i32_0 : i32, i32, i32
  }
}

</mosaic_0001>

<llo_original>
// kernel: sentence_mappings_producer.1
$region0: #{sentence_mappings_producer.1}
  #allocation0 [shape = 'u32[]', space=smem, size = 0x4, offset = 0x4, fixed_abs, tag = 'smem constant byte address 0x4 - core index']
  #allocation1 [shape = 'u32[144,128]{1,0:T(1,128)}', space=vmem, size = 0x12000, scoped, tag = 'internal scratch']
  %s0 = inlined_call_operand.vmem [shape: f32[2,8,32], index: 0, kind: input, shape index: {}]
  %s1 = inlined_call_operand.vmem [shape: f32[2,1,8], index: 1, kind: input, shape index: {}]
  %s2 = inlined_call_operand.vmem [shape: f32[1,32], index: 2, kind: input, shape index: {}]
  %s3 = inlined_call_operand.vmem [shape: f32[1,32], index: 3, kind: input, shape index: {}]
  %s4 = inlined_call_operand.vmem [shape: bf16[2,32,96], index: 4, kind: input, shape index: {}]
  %s5 = inlined_call_operand.vmem [shape: f32[2,1,96], index: 5, kind: input, shape index: {}]
  %s6 = inlined_call_operand.vmem [shape: bf16[2,32,32], index: 6, kind: input, shape index: {}]
  %s7 = inlined_call_operand.vmem [shape: f32[2,1,32], index: 7, kind: input, shape index: {}]
  %s8 = inlined_call_operand.vmem [shape: f32[2,1,32], index: 8, kind: input, shape index: {}]
  %s9 = inlined_call_operand.vmem [shape: f32[2,1,32], index: 9, kind: input, shape index: {}]
  %s10 = inlined_call_operand.vmem [shape: bf16[2,32,64], index: 10, kind: input, shape index: {}]
  %s11 = inlined_call_operand.vmem [shape: f32[2,1,64], index: 11, kind: input, shape index: {}]
  %s12 = inlined_call_operand.vmem [shape: bf16[2,64,32], index: 12, kind: input, shape index: {}]
  %s13 = inlined_call_operand.vmem [shape: f32[2,1,32], index: 13, kind: input, shape index: {}]
  %s14 = inlined_call_operand.vmem [shape: f32[2,1,32], index: 14, kind: input, shape index: {}]
  %s15 = inlined_call_operand.vmem [shape: f32[2,1,32], index: 15, kind: input, shape index: {}]
  %s16 = inlined_call_operand.vmem [shape: bf16[32,8], index: 16, kind: input, shape index: {}]
  %s17 = inlined_call_operand.vmem [shape: f32[1,8], index: 17, kind: input, shape index: {}]
  %s18 = inlined_call_operand.hbm [shape: f32[2,1,8], index: 18, kind: output, shape index: {}]
  %s19 = sld [smem:[#allocation0]]
  $region105: #{sentence_mappings_producer.1} parent=0
    _
  %s21 = ssub.s32 1, %s19
  %s22 = scalar_select 0, %s21, %s19
  $region1: #{sentence_mappings_producer.1} parent=0
    #allocation2 [shape = 'u8[1024]{0}', space=vmem, size = 0x400, scoped, tag = 'output window, operand 0']
    #allocation3 [shape = 's32[2]{0}', space=sflag, size = 0x8, scoped, tag = 'scoped memory for sentence_mappings_producer.1']
    %23 = vsyncpa [#allocation3], 0
    %s24 = scalar_lea.sflag [#allocation3], 1
    %25 = vsyncpa %s24, 0
    loop: start=0, step=1, limit=4
    $region2: #{sentence_mappings_producer.1} parent=1 // loop_pre_header
      _
    $region3: #{sentence_mappings_producer.1} parent=1 // loop_header
      %s27 = sphi 0, %s31
      %p28 = scmp.ge.s32.totalorder %s27, 4
      %s37 = sphi 0, %s39
      %s40 = sphi 0, %s37
      %s41 = sphi 0, %s40
      %s57 = sphi 0, %s41
      %s63 = sphi 0, %s65
      %s66 = sphi 0, %s63
      %s67 = sphi 0, %s66
      %s83 = sphi 0, %s67
      %s87 = sphi 0, %s87
      %s89 = sphi 0, %s87
      %s90 = sphi 0, %s89
      %s104 = sphi 0, %s90
      %s108 = sphi 0, %s108
      %s110 = sphi 0, %s108
      %s111 = sphi 0, %s110
      %s125 = sphi 0, %s111
      %s129 = sphi 0, %s129
      %s131 = sphi 0, %s129
      %s132 = sphi 0, %s131
      %s146 = sphi 0, %s132
      %s150 = sphi 0, %s150
      %s152 = sphi 0, %s150
      %s153 = sphi 0, %s152
      %s167 = sphi 0, %s153
      %s171 = sphi 0, %s171
      %s173 = sphi 0, %s171
      %s174 = sphi 0, %s173
      %s188 = sphi 0, %s174
      %s192 = sphi 0, %s192
      %s194 = sphi 0, %s192
      %s195 = sphi 0, %s194
      %s209 = sphi 0, %s195
      %s213 = sphi 0, %s213
      %s215 = sphi 0, %s213
      %s216 = sphi 0, %s215
      %s230 = sphi 0, %s216
      %s234 = sphi 0, %s234
      %s236 = sphi 0, %s234
      %s237 = sphi 0, %s236
      %s251 = sphi 0, %s237
      %s255 = sphi 0, %s255
      %s257 = sphi 0, %s255
      %s258 = sphi 0, %s257
      %s272 = sphi 0, %s258
      %s276 = sphi 0, %s276
      %s278 = sphi 0, %s276
      %s279 = sphi 0, %s278
      %s293 = sphi 0, %s279
      %s297 = sphi 0, %s297
      %s299 = sphi 0, %s297
      %s300 = sphi 0, %s299
      %s314 = sphi 0, %s300
      %s318 = sphi 0, %s318
      %s320 = sphi 0, %s318
      %s321 = sphi 0, %s320
      %s335 = sphi 0, %s321
      %s339 = sphi 0, %s339
      %s341 = sphi 0, %s339
      %s342 = sphi 0, %s341
      %s356 = sphi 0, %s342
      %s360 = sphi 0, %s360
      %s362 = sphi 0, %s360
      %s363 = sphi 0, %s362
      %s377 = sphi 0, %s363
      %s381 = sphi 0, %s381
      %s383 = sphi 0, %s381
      %s384 = sphi 0, %s383
      %s398 = sphi 0, %s384
      %s402 = sphi 0, %s402
      %s404 = sphi 0, %s402
      %s405 = sphi 0, %s404
      %s419 = sphi 0, %s405
      %s425 = sphi 0, %s427
      %s428 = sphi 0, %s425
      %s429 = sphi 0, %s428
      %s445 = sphi 0, %s429
    $region4: #{sentence_mappings_producer.1} parent=1 // loop_header_branch
      %30 = sbr.rel (%p28) target = $region8
    $region5: #{sentence_mappings_producer.1} parent=1 // loop_body
      %s32 = ssub.s32 %s27, 1
      %s33 = ssub.s32 %s27, 2
      %s34 = sadd.s32 %s27, 1
      %s35 = ssub.s32 %s27, %s34
      %p36 = scmp.eq.s32.totalorder %s35, 0
      %s38 = sadd.s32 %s37, 1
      %s39 = scalar_select %p36, %s37, %s38
      %p42 = pneg %p36
      %p43 = scmp.eq.s32.totalorder %s27, 1
      %p44 = por %p42, %p43
      %p45 = scmp.ne.s32.totalorder %s37, %s40
      %p46 = scmp.eq.s32.totalorder %s27, 0
      %p47 = por %p45, %p46
      %p48 = scmp.ne.s32.totalorder %s37, %s40
      %p49 = scmp.eq.s32.totalorder %s32, 1
      %p50 = por %p48, %p49
      %p51 = scmp.ne.s32.totalorder %s40, %s41
      %p52 = scmp.eq.s32.totalorder %s32, 0
      %p53 = por %p51, %p52
      %p54 = scmp.ne.s32.totalorder %s40, %s41
      %p55 = scmp.eq.s32.totalorder %s33, 1
      %p56 = por %p54, %p55
      %p58 = scmp.ne.s32.totalorder %s41, %s57
      %p59 = scmp.eq.s32.totalorder %s33, 0
      %p60 = por %p58, %p59
      %s61 = ssub.s32 %s27, %s34
      %p62 = scmp.eq.s32.totalorder %s61, 0
      %s64 = sadd.s32 %s63, 1
      %s65 = scalar_select %p62, %s63, %s64
      %p68 = pneg %p62
      %p69 = scmp.eq.s32.totalorder %s27, 1
      %p70 = por %p68, %p69
      %p71 = scmp.ne.s32.totalorder %s63, %s66
      %p72 = scmp.eq.s32.totalorder %s27, 0
      %p73 = por %p71, %p72
      %p74 = scmp.ne.s32.totalorder %s63, %s66
      %p75 = scmp.eq.s32.totalorder %s32, 1
      %p76 = por %p74, %p75
      %p77 = scmp.ne.s32.totalorder %s66, %s67
      %p78 = scmp.eq.s32.totalorder %s32, 0
      %p79 = por %p77, %p78
      %p80 = scmp.ne.s32.totalorder %s66, %s67
      %p81 = scmp.eq.s32.totalorder %s33, 1
      %p82 = por %p80, %p81
      %p84 = scmp.ne.s32.totalorder %s67, %s83
      %p85 = scmp.eq.s32.totalorder %s33, 0
      %p86 = por %p84, %p85
      %s88 = sadd.s32 %s87, 1
      %p91 = scmp.eq.s32.totalorder %s27, 1
      %p92 = scmp.ne.s32.totalorder %s87, %s89
      %p93 = scmp.eq.s32.totalorder %s27, 0
      %p94 = por %p92, %p93
      %p95 = scmp.ne.s32.totalorder %s87, %s89
      %p96 = scmp.eq.s32.totalorder %s32, 1
      %p97 = por %p95, %p96
      %p98 = scmp.ne.s32.totalorder %s89, %s90
      %p99 = scmp.eq.s32.totalorder %s32, 0
      %p100 = por %p98, %p99
      %p101 = scmp.ne.s32.totalorder %s89, %s90
      %p102 = scmp.eq.s32.totalorder %s33, 1
      %p103 = por %p101, %p102
      %p105 = scmp.ne.s32.totalorder %s90, %s104
      %p106 = scmp.eq.s32.totalorder %s33, 0
      %p107 = por %p105, %p106
      %s109 = sadd.s32 %s108, 1
      %p112 = scmp.eq.s32.totalorder %s27, 1
      %p113 = scmp.ne.s32.totalorder %s108, %s110
      %p114 = scmp.eq.s32.totalorder %s27, 0
      %p115 = por %p113, %p114
      %p116 = scmp.ne.s32.totalorder %s108, %s110
      %p117 = scmp.eq.s32.totalorder %s32, 1
      %p118 = por %p116, %p117
      %p119 = scmp.ne.s32.totalorder %s110, %s111
      %p120 = scmp.eq.s32.totalorder %s32, 0
      %p121 = por %p119, %p120
      %p122 = scmp.ne.s32.totalorder %s110, %s111
      %p123 = scmp.eq.s32.totalorder %s33, 1
      %p124 = por %p122, %p123
      %p126 = scmp.ne.s32.totalorder %s111, %s125
      %p127 = scmp.eq.s32.totalorder %s33, 0
      %p128 = por %p126, %p127
      %s130 = sadd.s32 %s129, 1
      %p133 = scmp.eq.s32.totalorder %s27, 1
      %p134 = scmp.ne.s32.totalorder %s129, %s131
      %p135 = scmp.eq.s32.totalorder %s27, 0
      %p136 = por %p134, %p135
      %p137 = scmp.ne.s32.totalorder %s129, %s131
      %p138 = scmp.eq.s32.totalorder %s32, 1
      %p139 = por %p137, %p138
      %p140 = scmp.ne.s32.totalorder %s131, %s132
      %p141 = scmp.eq.s32.totalorder %s32, 0
      %p142 = por %p140, %p141
      %p143 = scmp.ne.s32.totalorder %s131, %s132
      %p144 = scmp.eq.s32.totalorder %s33, 1
      %p145 = por %p143, %p144
      %p147 = scmp.ne.s32.totalorder %s132, %s146
      %p148 = scmp.eq.s32.totalorder %s33, 0
      %p149 = por %p147, %p148
      %s151 = sadd.s32 %s150, 1
      %p154 = scmp.eq.s32.totalorder %s27, 1
      %p155 = scmp.ne.s32.totalorder %s150, %s152
      %p156 = scmp.eq.s32.totalorder %s27, 0
      %p157 = por %p155, %p156
      %p158 = scmp.ne.s32.totalorder %s150, %s152
      %p159 = scmp.eq.s32.totalorder %s32, 1
      %p160 = por %p158, %p159
      %p161 = scmp.ne.s32.totalorder %s152, %s153
      %p162 = scmp.eq.s32.totalorder %s32, 0
      %p163 = por %p161, %p162
      %p164 = scmp.ne.s32.totalorder %s152, %s153
      %p165 = scmp.eq.s32.totalorder %s33, 1
      %p166 = por %p164, %p165
      %p168 = scmp.ne.s32.totalorder %s153, %s167
      %p169 = scmp.eq.s32.totalorder %s33, 0
      %p170 = por %p168, %p169
      %s172 = sadd.s32 %s171, 1
      %p175 = scmp.eq.s32.totalorder %s27, 1
      %p176 = scmp.ne.s32.totalorder %s171, %s173
      %p177 = scmp.eq.s32.totalorder %s27, 0
      %p178 = por %p176, %p177
      %p179 = scmp.ne.s32.totalorder %s171, %s173
      %p180 = scmp.eq.s32.totalorder %s32, 1
      %p181 = por %p179, %p180
      %p182 = scmp.ne.s32.totalorder %s173, %s174
      %p183 = scmp.eq.s32.totalorder %s32, 0
      %p184 = por %p182, %p183
      %p185 = scmp.ne.s32.totalorder %s173, %s174
      %p186 = scmp.eq.s32.totalorder %s33, 1
      %p187 = por %p185, %p186
      %p189 = scmp.ne.s32.totalorder %s174, %s188
      %p190 = scmp.eq.s32.totalorder %s33, 0
      %p191 = por %p189, %p190
      %s193 = sadd.s32 %s192, 1
      %p196 = scmp.eq.s32.totalorder %s27, 1
      %p197 = scmp.ne.s32.totalorder %s192, %s194
      %p198 = scmp.eq.s32.totalorder %s27, 0
      %p199 = por %p197, %p198
      %p200 = scmp.ne.s32.totalorder %s192, %s194
      %p201 = scmp.eq.s32.totalorder %s32, 1
      %p202 = por %p200, %p201
      %p203 = scmp.ne.s32.totalorder %s194, %s195
      %p204 = scmp.eq.s32.totalorder %s32, 0
      %p205 = por %p203, %p204
      %p206 = scmp.ne.s32.totalorder %s194, %s195
      %p207 = scmp.eq.s32.totalorder %s33, 1
      %p208 = por %p206, %p207
      %p210 = scmp.ne.s32.totalorder %s195, %s209
      %p211 = scmp.eq.s32.totalorder %s33, 0
      %p212 = por %p210, %p211
      %s214 = sadd.s32 %s213, 1
      %p217 = scmp.eq.s32.totalorder %s27, 1
      %p218 = scmp.ne.s32.totalorder %s213, %s215
      %p219 = scmp.eq.s32.totalorder %s27, 0
      %p220 = por %p218, %p219
      %p221 = scmp.ne.s32.totalorder %s213, %s215
      %p222 = scmp.eq.s32.totalorder %s32, 1
      %p223 = por %p221, %p222
      %p224 = scmp.ne.s32.totalorder %s215, %s216
      %p225 = scmp.eq.s32.totalorder %s32, 0
      %p226 = por %p224, %p225
      %p227 = scmp.ne.s32.totalorder %s215, %s216
      %p228 = scmp.eq.s32.totalorder %s33, 1
      %p229 = por %p227, %p228
      %p231 = scmp.ne.s32.totalorder %s216, %s230
      %p232 = scmp.eq.s32.totalorder %s33, 0
      %p233 = por %p231, %p232
      %s235 = sadd.s32 %s234, 1
      %p238 = scmp.eq.s32.totalorder %s27, 1
      %p239 = scmp.ne.s32.totalorder %s234, %s236
      %p240 = scmp.eq.s32.totalorder %s27, 0
      %p241 = por %p239, %p240
      %p242 = scmp.ne.s32.totalorder %s234, %s236
      %p243 = scmp.eq.s32.totalorder %s32, 1
      %p244 = por %p242, %p243
      %p245 = scmp.ne.s32.totalorder %s236, %s237
      %p246 = scmp.eq.s32.totalorder %s32, 0
      %p247 = por %p245, %p246
      %p248 = scmp.ne.s32.totalorder %s236, %s237
      %p249 = scmp.eq.s32.totalorder %s33, 1
      %p250 = por %p248, %p249
      %p252 = scmp.ne.s32.totalorder %s237, %s251
      %p253 = scmp.eq.s32.totalorder %s33, 0
      %p254 = por %p252, %p253
      %s256 = sadd.s32 %s255, 1
      %p259 = scmp.eq.s32.totalorder %s27, 1
      %p260 = scmp.ne.s32.totalorder %s255, %s257
      %p261 = scmp.eq.s32.totalorder %s27, 0
      %p262 = por %p260, %p261
      %p263 = scmp.ne.s32.totalorder %s255, %s257
      %p264 = scmp.eq.s32.totalorder %s32, 1
      %p265 = por %p263, %p264
      %p266 = scmp.ne.s32.totalorder %s257, %s258
      %p267 = scmp.eq.s32.totalorder %s32, 0
      %p268 = por %p266, %p267
      %p269 = scmp.ne.s32.totalorder %s257, %s258
      %p270 = scmp.eq.s32.totalorder %s33, 1
      %p271 = por %p269, %p270
      %p273 = scmp.ne.s32.totalorder %s258, %s272
      %p274 = scmp.eq.s32.totalorder %s33, 0
      %p275 = por %p273, %p274
      %s277 = sadd.s32 %s276, 1
      %p280 = scmp.eq.s32.totalorder %s27, 1
      %p281 = scmp.ne.s32.totalorder %s276, %s278
      %p282 = scmp.eq.s32.totalorder %s27, 0
      %p283 = por %p281, %p282
      %p284 = scmp.ne.s32.totalorder %s276, %s278
      %p285 = scmp.eq.s32.totalorder %s32, 1
      %p286 = por %p284, %p285
      %p287 = scmp.ne.s32.totalorder %s278, %s279
      %p288 = scmp.eq.s32.totalorder %s32, 0
      %p289 = por %p287, %p288
      %p290 = scmp.ne.s32.totalorder %s278, %s279
      %p291 = scmp.eq.s32.totalorder %s33, 1
      %p292 = por %p290, %p291
      %p294 = scmp.ne.s32.totalorder %s279, %s293
      %p295 = scmp.eq.s32.totalorder %s33, 0
      %p296 = por %p294, %p295
      %s298 = sadd.s32 %s297, 1
      %p301 = scmp.eq.s32.totalorder %s27, 1
      %p302 = scmp.ne.s32.totalorder %s297, %s299
      %p303 = scmp.eq.s32.totalorder %s27, 0
      %p304 = por %p302, %p303
      %p305 = scmp.ne.s32.totalorder %s297, %s299
      %p306 = scmp.eq.s32.totalorder %s32, 1
      %p307 = por %p305, %p306
      %p308 = scmp.ne.s32.totalorder %s299, %s300
      %p309 = scmp.eq.s32.totalorder %s32, 0
      %p310 = por %p308, %p309
      %p311 = scmp.ne.s32.totalorder %s299, %s300
      %p312 = scmp.eq.s32.totalorder %s33, 1
      %p313 = por %p311, %p312
      %p315 = scmp.ne.s32.totalorder %s300, %s314
      %p316 = scmp.eq.s32.totalorder %s33, 0
      %p317 = por %p315, %p316
      %s319 = sadd.s32 %s318, 1
      %p322 = scmp.eq.s32.totalorder %s27, 1
      %p323 = scmp.ne.s32.totalorder %s318, %s320
      %p324 = scmp.eq.s32.totalorder %s27, 0
      %p325 = por %p323, %p324
      %p326 = scmp.ne.s32.totalorder %s318, %s320
      %p327 = scmp.eq.s32.totalorder %s32, 1
      %p328 = por %p326, %p327
      %p329 = scmp.ne.s32.totalorder %s320, %s321
      %p330 = scmp.eq.s32.totalorder %s32, 0
      %p331 = por %p329, %p330
      %p332 = scmp.ne.s32.totalorder %s320, %s321
      %p333 = scmp.eq.s32.totalorder %s33, 1
      %p334 = por %p332, %p333
      %p336 = scmp.ne.s32.totalorder %s321, %s335
      %p337 = scmp.eq.s32.totalorder %s33, 0
      %p338 = por %p336, %p337
      %s340 = sadd.s32 %s339, 1
      %p343 = scmp.eq.s32.totalorder %s27, 1
      %p344 = scmp.ne.s32.totalorder %s339, %s341
      %p345 = scmp.eq.s32.totalorder %s27, 0
      %p346 = por %p344, %p345
      %p347 = scmp.ne.s32.totalorder %s339, %s341
      %p348 = scmp.eq.s32.totalorder %s32, 1
      %p349 = por %p347, %p348
      %p350 = scmp.ne.s32.totalorder %s341, %s342
      %p351 = scmp.eq.s32.totalorder %s32, 0
      %p352 = por %p350, %p351
      %p353 = scmp.ne.s32.totalorder %s341, %s342
      %p354 = scmp.eq.s32.totalorder %s33, 1
      %p355 = por %p353, %p354
      %p357 = scmp.ne.s32.totalorder %s342, %s356
      %p358 = scmp.eq.s32.totalorder %s33, 0
      %p359 = por %p357, %p358
      %s361 = sadd.s32 %s360, 1
      %p364 = scmp.eq.s32.totalorder %s27, 1
      %p365 = scmp.ne.s32.totalorder %s360, %s362
      %p366 = scmp.eq.s32.totalorder %s27, 0
      %p367 = por %p365, %p366
      %p368 = scmp.ne.s32.totalorder %s360, %s362
      %p369 = scmp.eq.s32.totalorder %s32, 1
      %p370 = por %p368, %p369
      %p371 = scmp.ne.s32.totalorder %s362, %s363
      %p372 = scmp.eq.s32.totalorder %s32, 0
      %p373 = por %p371, %p372
      %p374 = scmp.ne.s32.totalorder %s362, %s363
      %p375 = scmp.eq.s32.totalorder %s33, 1
      %p376 = por %p374, %p375
      %p378 = scmp.ne.s32.totalorder %s363, %s377
      %p379 = scmp.eq.s32.totalorder %s33, 0
      %p380 = por %p378, %p379
      %s382 = sadd.s32 %s381, 1
      %p385 = scmp.eq.s32.totalorder %s27, 1
      %p386 = scmp.ne.s32.totalorder %s381, %s383
      %p387 = scmp.eq.s32.totalorder %s27, 0
      %p388 = por %p386, %p387
      %p389 = scmp.ne.s32.totalorder %s381, %s383
      %p390 = scmp.eq.s32.totalorder %s32, 1
      %p391 = por %p389, %p390
      %p392 = scmp.ne.s32.totalorder %s383, %s384
      %p393 = scmp.eq.s32.totalorder %s32, 0
      %p394 = por %p392, %p393
      %p395 = scmp.ne.s32.totalorder %s383, %s384
      %p396 = scmp.eq.s32.totalorder %s33, 1
      %p397 = por %p395, %p396
      %p399 = scmp.ne.s32.totalorder %s384, %s398
      %p400 = scmp.eq.s32.totalorder %s33, 0
      %p401 = por %p399, %p400
      %s403 = sadd.s32 %s402, 1
      %p406 = scmp.eq.s32.totalorder %s27, 1
      %p407 = scmp.ne.s32.totalorder %s402, %s404
      %p408 = scmp.eq.s32.totalorder %s27, 0
      %p409 = por %p407, %p408
      %p410 = scmp.ne.s32.totalorder %s402, %s404
      %p411 = scmp.eq.s32.totalorder %s32, 1
      %p412 = por %p410, %p411
      %p413 = scmp.ne.s32.totalorder %s404, %s405
      %p414 = scmp.eq.s32.totalorder %s32, 0
      %p415 = por %p413, %p414
      %p416 = scmp.ne.s32.totalorder %s404, %s405
      %p417 = scmp.eq.s32.totalorder %s33, 1
      %p418 = por %p416, %p417
      %p420 = scmp.ne.s32.totalorder %s405, %s419
      %p421 = scmp.eq.s32.totalorder %s33, 0
      %p422 = por %p420, %p421
      %s423 = ssub.s32 %s27, %s34
      %p424 = scmp.eq.s32.totalorder %s423, 0
      %s426 = sadd.s32 %s425, 1
      %s427 = scalar_select %p424, %s425, %s426
      %p430 = pneg %p424
      %p431 = scmp.eq.s32.totalorder %s27, 1
      %p432 = por %p430, %p431
      %p433 = scmp.ne.s32.totalorder %s425, %s428
      %p434 = scmp.eq.s32.totalorder %s27, 0
      %p435 = por %p433, %p434
      %p436 = scmp.ne.s32.totalorder %s425, %s428
      %p437 = scmp.eq.s32.totalorder %s32, 1
      %p438 = por %p436, %p437
      %p439 = scmp.ne.s32.totalorder %s428, %s429
      %p440 = scmp.eq.s32.totalorder %s32, 0
      %p441 = por %p439, %p440
      %p442 = scmp.ne.s32.totalorder %s428, %s429
      %p443 = scmp.eq.s32.totalorder %s33, 1
      %p444 = por %p442, %p443
      %p446 = scmp.ne.s32.totalorder %s429, %s445
      %p447 = scmp.eq.s32.totalorder %s33, 0
      %p448 = por %p446, %p447
      %p449 = scmp.le.s32.totalorder 1, %s27
      %p450 = scmp.lt.s32.totalorder %s27, 3
      %p451 = pnand %p449, %p450
      %p452 = pneg %p451
      // Predicated region
      $region9: #{sentence_mappings_producer.1} parent=5 // pred_check
        _
      $region10: #{sentence_mappings_producer.1} parent=5 // pred_check_branch
        %454 = sbr.rel (%p451) target = $region12
      $region11: #{sentence_mappings_producer.1} parent=5 // pred_region
        %s455 = ssub.s32 %s27, 1
        // Predicated region
        $region13: #{sentence_mappings_producer.1} parent=11 // pred_check
          %p456 = pneg %p100
        $region14: #{sentence_mappings_producer.1} parent=11 // pred_check_branch
          %458 = sbr.rel (%p456) target = $region16
        $region15: #{sentence_mappings_producer.1} parent=11 // pred_region
          _
        $region16: #{sentence_mappings_producer.1} parent=11 // pred_fallthru
          _
        // Predicated region
        $region17: #{sentence_mappings_producer.1} parent=11 // pred_check
          %p459 = pneg %p121
        $region18: #{sentence_mappings_producer.1} parent=11 // pred_check_branch
          %461 = sbr.rel (%p459) target = $region20
        $region19: #{sentence_mappings_producer.1} parent=11 // pred_region
          _
        $region20: #{sentence_mappings_producer.1} parent=11 // pred_fallthru
          _
        // Predicated region
        $region21: #{sentence_mappings_producer.1} parent=11 // pred_check
          %p462 = pneg %p142
        $region22: #{sentence_mappings_producer.1} parent=11 // pred_check_branch
          %464 = sbr.rel (%p462) target = $region24
        $region23: #{sentence_mappings_producer.1} parent=11 // pred_region
          _
        $region24: #{sentence_mappings_producer.1} parent=11 // pred_fallthru
          _
        // Predicated region
        $region25: #{sentence_mappings_producer.1} parent=11 // pred_check
          %p465 = pneg %p163
        $region26: #{sentence_mappings_producer.1} parent=11 // pred_check_branch
          %467 = sbr.rel (%p465) target = $region28
        $region27: #{sentence_mappings_producer.1} parent=11 // pred_region
          _
        $region28: #{sentence_mappings_producer.1} parent=11 // pred_fallthru
          _
        // Predicated region
        $region29: #{sentence_mappings_producer.1} parent=11 // pred_check
          %p468 = pneg %p184
        $region30: #{sentence_mappings_producer.1} parent=11 // pred_check_branch
          %470 = sbr.rel (%p468) target = $region32
        $region31: #{sentence_mappings_producer.1} parent=11 // pred_region
          _
        $region32: #{sentence_mappings_producer.1} parent=11 // pred_fallthru
          _
        // Predicated region
        $region33: #{sentence_mappings_producer.1} parent=11 // pred_check
          %p471 = pneg %p205
        $region34: #{sentence_mappings_producer.1} parent=11 // pred_check_branch
          %473 = sbr.rel (%p471) target = $region36
        $region35: #{sentence_mappings_producer.1} parent=11 // pred_region
          _
        $region36: #{sentence_mappings_producer.1} parent=11 // pred_fallthru
          _
        // Predicated region
        $region37: #{sentence_mappings_producer.1} parent=11 // pred_check
          %p474 = pneg %p226
        $region38: #{sentence_mappings_producer.1} parent=11 // pred_check_branch
          %476 = sbr.rel (%p474) target = $region40
        $region39: #{sentence_mappings_producer.1} parent=11 // pred_region
          _
        $region40: #{sentence_mappings_producer.1} parent=11 // pred_fallthru
          _
        // Predicated region
        $region41: #{sentence_mappings_producer.1} parent=11 // pred_check
          %p477 = pneg %p247
        $region42: #{sentence_mappings_producer.1} parent=11 // pred_check_branch
          %479 = sbr.rel (%p477) target = $region44
        $region43: #{sentence_mappings_producer.1} parent=11 // pred_region
          _
        $region44: #{sentence_mappings_producer.1} parent=11 // pred_fallthru
          _
        // Predicated region
        $region45: #{sentence_mappings_producer.1} parent=11 // pred_check
          %p480 = pneg %p268
        $region46: #{sentence_mappings_producer.1} parent=11 // pred_check_branch
          %482 = sbr.rel (%p480) target = $region48
        $region47: #{sentence_mappings_producer.1} parent=11 // pred_region
          _
        $region48: #{sentence_mappings_producer.1} parent=11 // pred_fallthru
          _
        // Predicated region
        $region49: #{sentence_mappings_producer.1} parent=11 // pred_check
          %p483 = pneg %p289
        $region50: #{sentence_mappings_producer.1} parent=11 // pred_check_branch
          %485 = sbr.rel (%p483) target = $region52
        $region51: #{sentence_mappings_producer.1} parent=11 // pred_region
          _
        $region52: #{sentence_mappings_producer.1} parent=11 // pred_fallthru
          _
        // Predicated region
        $region53: #{sentence_mappings_producer.1} parent=11 // pred_check
          %p486 = pneg %p310
        $region54: #{sentence_mappings_producer.1} parent=11 // pred_check_branch
          %488 = sbr.rel (%p486) target = $region56
        $region55: #{sentence_mappings_producer.1} parent=11 // pred_region
          _
        $region56: #{sentence_mappings_producer.1} parent=11 // pred_fallthru
          _
        // Predicated region
        $region57: #{sentence_mappings_producer.1} parent=11 // pred_check
          %p489 = pneg %p331
        $region58: #{sentence_mappings_producer.1} parent=11 // pred_check_branch
          %491 = sbr.rel (%p489) target = $region60
        $region59: #{sentence_mappings_producer.1} parent=11 // pred_region
          _
        $region60: #{sentence_mappings_producer.1} parent=11 // pred_fallthru
          _
        // Predicated region
        $region61: #{sentence_mappings_producer.1} parent=11 // pred_check
          %p492 = pneg %p352
        $region62: #{sentence_mappings_producer.1} parent=11 // pred_check_branch
          %494 = sbr.rel (%p492) target = $region64
        $region63: #{sentence_mappings_producer.1} parent=11 // pred_region
          _
        $region64: #{sentence_mappings_producer.1} parent=11 // pred_fallthru
          _
        // Predicated region
        $region65: #{sentence_mappings_producer.1} parent=11 // pred_check
          %p495 = pneg %p373
        $region66: #{sentence_mappings_producer.1} parent=11 // pred_check_branch
          %497 = sbr.rel (%p495) target = $region68
        $region67: #{sentence_mappings_producer.1} parent=11 // pred_region
          _
        $region68: #{sentence_mappings_producer.1} parent=11 // pred_fallthru
          _
        // Predicated region
        $region69: #{sentence_mappings_producer.1} parent=11 // pred_check
          %p498 = pneg %p394
        $region70: #{sentence_mappings_producer.1} parent=11 // pred_check_branch
          %500 = sbr.rel (%p498) target = $region72
        $region71: #{sentence_mappings_producer.1} parent=11 // pred_region
          _
        $region72: #{sentence_mappings_producer.1} parent=11 // pred_fallthru
          _
        // Predicated region
        $region73: #{sentence_mappings_producer.1} parent=11 // pred_check
          %p501 = pneg %p415
        $region74: #{sentence_mappings_producer.1} parent=11 // pred_check_branch
          %503 = sbr.rel (%p501) target = $region76
        $region75: #{sentence_mappings_producer.1} parent=11 // pred_region
          _
        $region76: #{sentence_mappings_producer.1} parent=11 // pred_fallthru
          _
      $region12: #{sentence_mappings_producer.1} parent=5 // pred_fallthru
        _
      %p504 = scmp.lt.s32.totalorder %s27, 2
      // Predicated region
      $region77: #{sentence_mappings_producer.1} parent=5 // pred_check
        %p505 = pneg %p504
      $region78: #{sentence_mappings_producer.1} parent=5 // pred_check_branch
        %507 = sbr.rel (%p505) target = $region80
      $region79: #{sentence_mappings_producer.1} parent=5 // pred_region
        // Predicated region
        $region81: #{sentence_mappings_producer.1} parent=79 // pred_check
          %p508 = pneg %p47
        $region82: #{sentence_mappings_producer.1} parent=79 // pred_check_branch
          %510 = sbr.rel (%p508) target = $region84
        $region83: #{sentence_mappings_producer.1} parent=79 // pred_region
          %p511 = scmp.lt.s32.totalorder %s27, 1
          %s512 = scalar_select %p511, %s27, 1
          %s513 = smul.addr %s512, 8
          %s514 = scalar_lea.vmem %s0, %s513
        $region84: #{sentence_mappings_producer.1} parent=79 // pred_fallthru
          _
        // Predicated region
        $region85: #{sentence_mappings_producer.1} parent=79 // pred_check
          %p515 = pneg %p73
        $region86: #{sentence_mappings_producer.1} parent=79 // pred_check_branch
          %517 = sbr.rel (%p515) target = $region88
        $region87: #{sentence_mappings_producer.1} parent=79 // pred_region
          %p518 = scmp.lt.s32.totalorder %s27, 1
          %s519 = scalar_select %p518, %s27, 1
          %s520 = scalar_lea.vmem %s1, %s519
        $region88: #{sentence_mappings_producer.1} parent=79 // pred_fallthru
          _
      $region80: #{sentence_mappings_producer.1} parent=5 // pred_fallthru
        _
      %p521 = scmp.le.s32.totalorder 1, %s27
      %p522 = scmp.lt.s32.totalorder %s27, 3
      %p523 = pnand %p521, %p522
      %p524 = pneg %p523
      // Predicated region
      $region89: #{sentence_mappings_producer.1} parent=5 // pred_check
        _
      $region90: #{sentence_mappings_producer.1} parent=5 // pred_check_branch
        %526 = sbr.rel (%p523) target = $region92
      $region91: #{sentence_mappings_producer.1} parent=5 // pred_region
        %s527 = ssub.s32 %s27, 1
        %p528 = scmp.lt.s32.totalorder %s32, 1
        %s529 = scalar_select %p528, %s32, 1
        %s530 = smul.addr %s529, 8
        %s531 = scalar_lea.vmem %s0, %s530
        %p532 = pneg %p53
        %p533 = pneg %p50
        %p534 = scmp.lt.s32.totalorder %s32, 1
        %s535 = scalar_select %p534, %s32, 1
        %s536 = scalar_lea.vmem %s1, %s535
        %p537 = pneg %p79
        %p538 = pneg %p76
        %p539 = pneg %p100
        %p540 = pneg %p97
        %p541 = pneg %p121
        %p542 = pneg %p118
        %p543 = pneg %p142
        %p544 = pneg %p139
        %p545 = pneg %p163
        %p546 = pneg %p160
        %p547 = pneg %p184
        %p548 = pneg %p181
        %p549 = pneg %p205
        %p550 = pneg %p202
        %p551 = pneg %p226
        %p552 = pneg %p223
        %p553 = pneg %p247
        %p554 = pneg %p244
        %p555 = pneg %p268
        %p556 = pneg %p265
        %p557 = pneg %p289
        %p558 = pneg %p286
        %p559 = pneg %p310
        %p560 = pneg %p307
        %p561 = pneg %p331
        %p562 = pneg %p328
        %p563 = pneg %p352
        %p564 = pneg %p349
        %p565 = pneg %p373
        %p566 = pneg %p370
        %p567 = pneg %p394
        %p568 = pneg %p391
        %p569 = pneg %p415
        %p570 = pneg %p412
        %p571 = pneg %p441
        %p572 = pneg %p438
        %s573 = sand.u32 %s428, 1
        %s574 = scalar_lea.sflag [#allocation3], %s573
        %s575 = sand.u32 %s428, 1
        %s576 = scalar_lea.vmem [#allocation2], %s575
        %p577 = scmp.lt.s32.totalorder %s32, 1
        %s578 = scalar_select %p577, %s32, 1
        %s579 = smul.addr %s578, 8
        %s580 = scalar_lea.vmem %s0, %s579
        %p581 = scmp.lt.s32.totalorder %s32, 1
        %s582 = scalar_select %p581, %s32, 1
        %s583 = scalar_lea.vmem %s1, %s582
        %v585 = vld [vmem:[%s580] sm:$0xff]
        %v586 = vld [vmem:[%s2] sm:$0x1]
        %v587 = vld [vmem:[%s3] sm:$0x1]
        %vm588 = vcmask 261120
        %v589 = vsel %vm588, %v585, 0.0
        %590 = vadd.xlane.f32.xlu0 %v589
        %v591 = vpop.xlane.xlu0 %590
        %v592 = vrcp.pop 32.0
        %v593 = vmul.f32 %v591, %v592
        %v594 = vsub.f32 %v585, %v593
        %v595 = vmul.f32 %v594, %v594
        %v596 = vsel %vm588, %v595, 0.0
        %597 = vadd.xlane.f32.xlu0 %v596
        %v598 = vpop.xlane.xlu0 %597
        %v599 = vmul.f32 %v598, %v592
        %v600 = vadd.f32 %v599, 1e-12
        %v601 = vrsqrt.pop %v600
        %v602 = vmul.f32 %v594, %v601
        %v604 = vlaneseq
        %v605 = vshrl.u32 %v604, 7
        %v606 = vsub.s32 0, %v605
        %v607 = vrot.slane %v586, %v606
        %v609 = vmul.f32 %v602, %v607
        %v611 = vlaneseq
        %v612 = vshrl.u32 %v611, 7
        %v613 = vsub.s32 0, %v612
        %v614 = vrot.slane %v587, %v613
        %v616 = vadd.f32 %v609, %v614
        %v617 = vld [vmem:[%s583] sm:$0x1]
        %v618 = vpack.c.bf16 %v616, %v616
        %v619 = vld [vmem:[%s4] sm:$0xf]
        %v620 = vld [vmem:[%s4 + $0x4] sm:$0xf]
        %v621 = vld [vmem:[%s4 + $0x8] sm:$0xf]
        %v622 = vld [vmem:[%s4 + $0xc] sm:$0xf]
        %v623 = vld [vmem:[%s5] sm:$0x1]
        %v625 = vlaneseq
        %v626 = vshrl.u32 %v625, 7
        %v627 = vsub.s32 0, %v626
        %v628 = vrot.slane %v623, %v627
        %v634 = vunpack.c.l.b16 %v619
        %v635 = vunpack.c.l.b16 %v620
        %v636 = vunpack.c.l.b16 %v621
        %v637 = vunpack.c.l.b16 %v622
        %v638 = vpack.c.b16 %v635, %v634
        %v639 = vpack.c.b16 %v637, %v636
        %v643 = vsel %vm588, %v618, 0
        %645 = vmatprep.subr.bf16.mxu0 0
        %646 = vmatpush1.bf16.msra.mxu0 %v638
        %647 = vmatprep.subr.bf16.mxu0 0
        %648 = vmatpush1.bf16.msra.mxu0 %v639
        %649 = vmatprep.subr.bf16.mxu0 0
        %650 = vmatpush1.bf16.msra.mxu0 0
        %651 = vmatprep.subr.bf16.mxu0 0
        %652 = vmatpush1.bf16.msra.mxu0 0
        %653 = vmatprep.subr.bf16.mxu0 0
        %654 = vmatpush1.bf16.msra.mxu0 0
        %655 = vmatprep.subr.bf16.mxu0 0
        %656 = vmatpush1.bf16.msra.mxu0 0
        %657 = vmatprep.subr.bf16.mxu0 0
        %658 = vmatpush1.bf16.msra.mxu0 0
        %659 = vmatprep.subr.bf16.mxu0 0
        %660 = vmatpush1.bf16.msra.mxu0 0
        %661 = vmatprep.subr.bf16.mxu0 0
        %662 = vmatpush1.bf16.msra.mxu0 0
        %663 = vmatprep.subr.bf16.mxu0 0
        %664 = vmatpush1.bf16.msra.mxu0 0
        %665 = vmatprep.subr.bf16.mxu0 0
        %666 = vmatpush1.bf16.msra.mxu0 0
        %667 = vmatprep.subr.bf16.mxu0 0
        %668 = vmatpush1.bf16.msra.mxu0 0
        %669 = vmatprep.subr.bf16.mxu0 0
        %670 = vmatpush1.bf16.msra.mxu0 0
        %671 = vmatprep.subr.bf16.mxu0 0
        %672 = vmatpush1.bf16.msra.mxu0 0
        %673 = vmatprep.subr.bf16.mxu0 0
        %674 = vmatpush1.bf16.msra.mxu0 0
        %675 = vmatprep.subr.bf16.mxu0 0
        %676 = vmatpush1.bf16.msra.mxu0 0
        %677 = vmatprep.mubr.bf16.mxu0 0
        %678 = vmatmul.mubr.bf16.gmra.mrb[0].mxu0 %v643
        %v679 = vpop.f32.mrb[0].mxu0
        %v680 = vadd.f32 %v628, %v679
        %v681 = vpop.f32.mrb[0].mxu0
        %v682 = vpop.f32.mrb[0].mxu0
        %v683 = vpop.f32.mrb[0].mxu0
        %684 = vdwg.mxu0
        %v685 = vpack.c.bf16 %v680, %v680
        %v687 = vlaneseq
        %v688 = vshrl.u32 %v687, 7
        %v689 = vsub.s32 0, %v688
        %v690 = vrot.slane %v617, %v689
        %693 = vrot.lane.b32.xlu0 %v685, 96
        %v694 = vpop.permute.xlu0 %693
        %vm695 = vcmask 130048
        %v697 = vsel %vm695, %v685, 0
        %v700 = vsel %vm695, %v694, 0
        %702 = vmatprep.subr.bf16.mxu0 0
        %703 = vmatpush1.bf16.xpose.msra.mxu0 %v700
        %704 = vmatprep.subr.bf16.mxu0 0
        %705 = vmatpush1.bf16.xpose.msra.mxu0 0
        %706 = vmatprep.subr.bf16.mxu0 0
        %707 = vmatpush1.bf16.xpose.msra.mxu0 0
        %708 = vmatprep.subr.bf16.mxu0 0
        %709 = vmatpush1.bf16.xpose.msra.mxu0 0
        %710 = vmatprep.subr.bf16.mxu0 0
        %711 = vmatpush1.bf16.xpose.msra.mxu0 0
        %712 = vmatprep.subr.bf16.mxu0 0
        %713 = vmatpush1.bf16.xpose.msra.mxu0 0
        %714 = vmatprep.subr.bf16.mxu0 0
        %715 = vmatpush1.bf16.xpose.msra.mxu0 0
        %716 = vmatprep.subr.bf16.mxu0 0
        %717 = vmatpush1.bf16.xpose.msra.mxu0 0
        %718 = vmatprep.subr.bf16.mxu0 0
        %719 = vmatpush1.bf16.xpose.msra.mxu0 0
        %720 = vmatprep.subr.bf16.mxu0 0
        %721 = vmatpush1.bf16.xpose.msra.mxu0 0
        %722 = vmatprep.subr.bf16.mxu0 0
        %723 = vmatpush1.bf16.xpose.msra.mxu0 0
        %724 = vmatprep.subr.bf16.mxu0 0
        %725 = vmatpush1.bf16.xpose.msra.mxu0 0
        %726 = vmatprep.subr.bf16.mxu0 0
        %727 = vmatpush1.bf16.xpose.msra.mxu0 0
        %728 = vmatprep.subr.bf16.mxu0 0
        %729 = vmatpush1.bf16.xpose.msra.mxu0 0
        %730 = vmatprep.subr.bf16.mxu0 0
        %731 = vmatpush1.bf16.xpose.msra.mxu0 0
        %732 = vmatprep.subr.bf16.mxu0 0
        %733 = vmatpush1.bf16.xpose.msra.mxu0 0
        %734 = vmatprep.mubr.bf16.mxu0 0
        %735 = vmatmul.mubr.bf16.gmra.mrb[0].mxu0 %v697
        %v736 = vpop.f32.mrb[0].mxu0
        %v737 = vadd.f32 %v690, %v736
        %v738 = vpop.f32.mrb[0].mxu0
        %v739 = vpop.f32.mrb[0].mxu0
        %v740 = vpop.f32.mrb[0].mxu0
        %741 = vdwg.mxu0
        %vm742 = vcmask 64512
        %v743 = vsel %vm742, %v737, -inf
        %744 = vmax.xlane.f32.xlu0 %v743
        %v745 = vpop.xlane.xlu0 %744
        %v746 = vsub.f32 %v737, %v745
        %v747 = vmul.f32 %v746, 1.442695
        %v748 = vpow.pop %v747
        %v749 = vsel %vm742, %v748, 0.0
        %750 = vadd.xlane.f32.xlu0 %v749
        %v751 = vpop.xlane.xlu0 %750
        %v752 = vrcp.pop %v751
        %v753 = vmul.f32 %v748, %v752
        %v754 = vpack.c.bf16 %v753, %v753
        %755 = vrot.lane.b32.xlu0 %v685, 64
        %v756 = vpop.permute.xlu0 %755
        %v758 = vsel %vm742, %v754, 0
        %vm760 = vcmask 1043456
        %v762 = vsel %vm760, %v756, 0
        %764 = vmatprep.subr.bf16.mxu0 0
        %765 = vmatpush1.bf16.msra.mxu0 %v762
        %766 = vmatprep.subr.bf16.mxu0 0
        %767 = vmatpush1.bf16.msra.mxu0 0
        %768 = vmatprep.subr.bf16.mxu0 0
        %769 = vmatpush1.bf16.msra.mxu0 0
        %770 = vmatprep.subr.bf16.mxu0 0
        %771 = vmatpush1.bf16.msra.mxu0 0
        %772 = vmatprep.subr.bf16.mxu0 0
        %773 = vmatpush1.bf16.msra.mxu0 0
        %774 = vmatprep.subr.bf16.mxu0 0
        %775 = vmatpush1.bf16.msra.mxu0 0
        %776 = vmatprep.subr.bf16.mxu0 0
        %777 = vmatpush1.bf16.msra.mxu0 0
        %778 = vmatprep.subr.bf16.mxu0 0
        %779 = vmatpush1.bf16.msra.mxu0 0
        %780 = vmatprep.subr.bf16.mxu0 0
        %781 = vmatpush1.bf16.msra.mxu0 0
        %782 = vmatprep.subr.bf16.mxu0 0
        %783 = vmatpush1.bf16.msra.mxu0 0
        %784 = vmatprep.subr.bf16.mxu0 0
        %785 = vmatpush1.bf16.msra.mxu0 0
        %786 = vmatprep.subr.bf16.mxu0 0
        %787 = vmatpush1.bf16.msra.mxu0 0
        %788 = vmatprep.subr.bf16.mxu0 0
        %789 = vmatpush1.bf16.msra.mxu0 0
        %790 = vmatprep.subr.bf16.mxu0 0
        %791 = vmatpush1.bf16.msra.mxu0 0
        %792 = vmatprep.subr.bf16.mxu0 0
        %793 = vmatpush1.bf16.msra.mxu0 0
        %794 = vmatprep.subr.bf16.mxu0 0
        %795 = vmatpush1.bf16.msra.mxu0 0
        %796 = vmatprep.mubr.bf16.mxu0 0
        %797 = vmatmul.mubr.bf16.gmra.mrb[0].mxu0 %v758
        %v798 = vpop.f32.mrb[0].mxu0
        %v799 = vadd.f32 0.0, %v798
        %v800 = vpop.f32.mrb[0].mxu0
        %v801 = vpop.f32.mrb[0].mxu0
        %v802 = vpop.f32.mrb[0].mxu0
        %803 = vdwg.mxu0
        %804 = vrot.lane.b32.xlu0 %v685, 112
        %v805 = vpop.permute.xlu0 %804
        %806 = vrot.lane.b32.xlu0 %v685, 80
        %v807 = vpop.permute.xlu0 %806
        %v809 = vsel %vm695, %v805, 0
        %v812 = vsel %vm695, %v807, 0
        %814 = vmatprep.subr.bf16.mxu0 0
        %815 = vmatpush1.bf16.xpose.msra.mxu0 %v812
        %816 = vmatprep.subr.bf16.mxu0 0
        %817 = vmatpush1.bf16.xpose.msra.mxu0 0
        %818 = vmatprep.subr.bf16.mxu0 0
        %819 = vmatpush1.bf16.xpose.msra.mxu0 0
        %820 = vmatprep.subr.bf16.mxu0 0
        %821 = vmatpush1.bf16.xpose.msra.mxu0 0
        %822 = vmatprep.subr.bf16.mxu0 0
        %823 = vmatpush1.bf16.xpose.msra.mxu0 0
        %824 = vmatprep.subr.bf16.mxu0 0
        %825 = vmatpush1.bf16.xpose.msra.mxu0 0
        %826 = vmatprep.subr.bf16.mxu0 0
        %827 = vmatpush1.bf16.xpose.msra.mxu0 0
        %828 = vmatprep.subr.bf16.mxu0 0
        %829 = vmatpush1.bf16.xpose.msra.mxu0 0
        %830 = vmatprep.subr.bf16.mxu0 0
        %831 = vmatpush1.bf16.xpose.msra.mxu0 0
        %832 = vmatprep.subr.bf16.mxu0 0
        %833 = vmatpush1.bf16.xpose.msra.mxu0 0
        %834 = vmatprep.subr.bf16.mxu0 0
        %835 = vmatpush1.bf16.xpose.msra.mxu0 0
        %836 = vmatprep.subr.bf16.mxu0 0
        %837 = vmatpush1.bf16.xpose.msra.mxu0 0
        %838 = vmatprep.subr.bf16.mxu0 0
        %839 = vmatpush1.bf16.xpose.msra.mxu0 0
        %840 = vmatprep.subr.bf16.mxu0 0
        %841 = vmatpush1.bf16.xpose.msra.mxu0 0
        %842 = vmatprep.subr.bf16.mxu0 0
        %843 = vmatpush1.bf16.xpose.msra.mxu0 0
        %844 = vmatprep.subr.bf16.mxu0 0
        %845 = vmatpush1.bf16.xpose.msra.mxu0 0
        %846 = vmatprep.mubr.bf16.mxu0 0
        %847 = vmatmul.mubr.bf16.gmra.mrb[0].mxu0 %v809
        %v848 = vpop.f32.mrb[0].mxu0
        %v849 = vadd.f32 %v690, %v848
        %v850 = vpop.f32.mrb[0].mxu0
        %v851 = vpop.f32.mrb[0].mxu0
        %v852 = vpop.f32.mrb[0].mxu0
        %853 = vdwg.mxu0
        %v854 = vsel %vm742, %v849, -inf
        %855 = vmax.xlane.f32.xlu0 %v854
        %v856 = vpop.xlane.xlu0 %855
        %v857 = vsub.f32 %v849, %v856
        %v858 = vmul.f32 %v857, 1.442695
        %v859 = vpow.pop %v858
        %v860 = vsel %vm742, %v859, 0.0
        %861 = vadd.xlane.f32.xlu0 %v860
        %v862 = vpop.xlane.xlu0 %861
        %v863 = vrcp.pop %v862
        %v864 = vmul.f32 %v859, %v863
        %v865 = vpack.c.bf16 %v864, %v864
        %866 = vrot.lane.b32.xlu0 %v685, 48
        %v867 = vpop.permute.xlu0 %866
        %v869 = vsel %vm742, %v865, 0
        %v872 = vsel %vm760, %v867, 0
        %874 = vmatprep.subr.bf16.mxu0 0
        %875 = vmatpush1.bf16.msra.mxu0 %v872
        %876 = vmatprep.subr.bf16.mxu0 0
        %877 = vmatpush1.bf16.msra.mxu0 0
        %878 = vmatprep.subr.bf16.mxu0 0
        %879 = vmatpush1.bf16.msra.mxu0 0
        %880 = vmatprep.subr.bf16.mxu0 0
        %881 = vmatpush1.bf16.msra.mxu0 0
        %882 = vmatprep.subr.bf16.mxu0 0
        %883 = vmatpush1.bf16.msra.mxu0 0
        %884 = vmatprep.subr.bf16.mxu0 0
        %885 = vmatpush1.bf16.msra.mxu0 0
        %886 = vmatprep.subr.bf16.mxu0 0
        %887 = vmatpush1.bf16.msra.mxu0 0
        %888 = vmatprep.subr.bf16.mxu0 0
        %889 = vmatpush1.bf16.msra.mxu0 0
        %890 = vmatprep.subr.bf16.mxu0 0
        %891 = vmatpush1.bf16.msra.mxu0 0
        %892 = vmatprep.subr.bf16.mxu0 0
        %893 = vmatpush1.bf16.msra.mxu0 0
        %894 = vmatprep.subr.bf16.mxu0 0
        %895 = vmatpush1.bf16.msra.mxu0 0
        %896 = vmatprep.subr.bf16.mxu0 0
        %897 = vmatpush1.bf16.msra.mxu0 0
        %898 = vmatprep.subr.bf16.mxu0 0
        %899 = vmatpush1.bf16.msra.mxu0 0
        %900 = vmatprep.subr.bf16.mxu0 0
        %901 = vmatpush1.bf16.msra.mxu0 0
        %902 = vmatprep.subr.bf16.mxu0 0
        %903 = vmatpush1.bf16.msra.mxu0 0
        %904 = vmatprep.subr.bf16.mxu0 0
        %905 = vmatpush1.bf16.msra.mxu0 0
        %906 = vmatprep.mubr.bf16.mxu0 0
        %907 = vmatmul.mubr.bf16.gmra.mrb[0].mxu0 %v869
        %v908 = vpop.f32.mrb[0].mxu0
        %v909 = vadd.f32 0.0, %v908
        %v910 = vpop.f32.mrb[0].mxu0
        %v911 = vpop.f32.mrb[0].mxu0
        %v912 = vpop.f32.mrb[0].mxu0
        %913 = vdwg.mxu0
        %915 = vrot.lane.b32.xlu0 %v909, 16
        %v916 = vpop.permute.xlu0 %915
        %v918 = vsel %vm695, %v799, %v916
        %v919 = vpack.c.bf16 %v918, %v918
        %v920 = vld [vmem:[%s6] sm:$0xf]
        %v921 = vld [vmem:[%s6 + $0x4] sm:$0xf]
        %v922 = vld [vmem:[%s6 + $0x8] sm:$0xf]
        %v923 = vld [vmem:[%s6 + $0xc] sm:$0xf]
        %v924 = vld [vmem:[%s7] sm:$0x1]
        %v926 = vlaneseq
        %v927 = vshrl.u32 %v926, 7
        %v928 = vsub.s32 0, %v927
        %v929 = vrot.slane %v924, %v928
        %v935 = vunpack.c.l.b16 %v920
        %v936 = vunpack.c.l.b16 %v921
        %v937 = vunpack.c.l.b16 %v922
        %v938 = vunpack.c.l.b16 %v923
        %v939 = vpack.c.b16 %v936, %v935
        %v940 = vpack.c.b16 %v938, %v937
        %v944 = vsel %vm588, %v919, 0
        %946 = vmatprep.subr.bf16.mxu0 0
        %947 = vmatpush1.bf16.msra.mxu0 %v939
        %948 = vmatprep.subr.bf16.mxu0 0
        %949 = vmatpush1.bf16.msra.mxu0 %v940
        %950 = vmatprep.subr.bf16.mxu0 0
        %951 = vmatpush1.bf16.msra.mxu0 0
        %952 = vmatprep.subr.bf16.mxu0 0
        %953 = vmatpush1.bf16.msra.mxu0 0
        %954 = vmatprep.subr.bf16.mxu0 0
        %955 = vmatpush1.bf16.msra.mxu0 0
        %956 = vmatprep.subr.bf16.mxu0 0
        %957 = vmatpush1.bf16.msra.mxu0 0
        %958 = vmatprep.subr.bf16.mxu0 0
        %959 = vmatpush1.bf16.msra.mxu0 0
        %960 = vmatprep.subr.bf16.mxu0 0
        %961 = vmatpush1.bf16.msra.mxu0 0
        %962 = vmatprep.subr.bf16.mxu0 0
        %963 = vmatpush1.bf16.msra.mxu0 0
        %964 = vmatprep.subr.bf16.mxu0 0
        %965 = vmatpush1.bf16.msra.mxu0 0
        %966 = vmatprep.subr.bf16.mxu0 0
        %967 = vmatpush1.bf16.msra.mxu0 0
        %968 = vmatprep.subr.bf16.mxu0 0
        %969 = vmatpush1.bf16.msra.mxu0 0
        %970 = vmatprep.subr.bf16.mxu0 0
        %971 = vmatpush1.bf16.msra.mxu0 0
        %972 = vmatprep.subr.bf16.mxu0 0
        %973 = vmatpush1.bf16.msra.mxu0 0
        %974 = vmatprep.subr.bf16.mxu0 0
        %975 = vmatpush1.bf16.msra.mxu0 0
        %976 = vmatprep.subr.bf16.mxu0 0
        %977 = vmatpush1.bf16.msra.mxu0 0
        %978 = vmatprep.mubr.bf16.mxu0 0
        %979 = vmatmul.mubr.bf16.gmra.mrb[0].mxu0 %v944
        %v980 = vpop.f32.mrb[0].mxu0
        %v981 = vadd.f32 %v929, %v980
        %v982 = vpop.f32.mrb[0].mxu0
        %v983 = vpop.f32.mrb[0].mxu0
        %v984 = vpop.f32.mrb[0].mxu0
        %985 = vdwg.mxu0
        %v986 = vadd.f32 %v981, %v616
        %v987 = vld [vmem:[%s8] sm:$0x1]
        %v988 = vld [vmem:[%s9] sm:$0x1]
        %v989 = vsel %vm588, %v986, 0.0
        %990 = vadd.xlane.f32.xlu0 %v989
        %v991 = vpop.xlane.xlu0 %990
        %v992 = vmul.f32 %v991, %v592
        %v993 = vsub.f32 %v986, %v992
        %v994 = vmul.f32 %v993, %v993
        %v995 = vsel %vm588, %v994, 0.0
        %996 = vadd.xlane.f32.xlu0 %v995
        %v997 = vpop.xlane.xlu0 %996
        %v998 = vmul.f32 %v997, %v592
        %v999 = vadd.f32 %v998, 1e-12
        %v1000 = vrsqrt.pop %v999
        %v1001 = vmul.f32 %v993, %v1000
        %v1003 = vlaneseq
        %v1004 = vshrl.u32 %v1003, 7
        %v1005 = vsub.s32 0, %v1004
        %v1006 = vrot.slane %v987, %v1005
        %v1008 = vmul.f32 %v1001, %v1006
        %v1010 = vlaneseq
        %v1011 = vshrl.u32 %v1010, 7
        %v1012 = vsub.s32 0, %v1011
        %v1013 = vrot.slane %v988, %v1012
        %v1015 = vadd.f32 %v1008, %v1013
        %v1016 = vpack.c.bf16 %v1015, %v1015
        %v1017 = vld [vmem:[%s10] sm:$0xf]
        %v1018 = vld [vmem:[%s10 + $0x4] sm:$0xf]
        %v1019 = vld [vmem:[%s10 + $0x8] sm:$0xf]
        %v1020 = vld [vmem:[%s10 + $0xc] sm:$0xf]
        %v1021 = vld [vmem:[%s11] sm:$0x1]
        %v1023 = vlaneseq
        %v1024 = vshrl.u32 %v1023, 7
        %v1025 = vsub.s32 0, %v1024
        %v1026 = vrot.slane %v1021, %v1025
        %v1032 = vunpack.c.l.b16 %v1017
        %v1033 = vunpack.c.l.b16 %v1018
        %v1034 = vunpack.c.l.b16 %v1019
        %v1035 = vunpack.c.l.b16 %v1020
        %v1036 = vpack.c.b16 %v1033, %v1032
        %v1037 = vpack.c.b16 %v1035, %v1034
        %v1041 = vsel %vm588, %v1016, 0
        %1043 = vmatprep.subr.bf16.mxu0 0
        %1044 = vmatpush1.bf16.msra.mxu0 %v1036
        %1045 = vmatprep.subr.bf16.mxu0 0
        %1046 = vmatpush1.bf16.msra.mxu0 %v1037
        %1047 = vmatprep.subr.bf16.mxu0 0
        %1048 = vmatpush1.bf16.msra.mxu0 0
        %1049 = vmatprep.subr.bf16.mxu0 0
        %1050 = vmatpush1.bf16.msra.mxu0 0
        %1051 = vmatprep.subr.bf16.mxu0 0
        %1052 = vmatpush1.bf16.msra.mxu0 0
        %1053 = vmatprep.subr.bf16.mxu0 0
        %1054 = vmatpush1.bf16.msra.mxu0 0
        %1055 = vmatprep.subr.bf16.mxu0 0
        %1056 = vmatpush1.bf16.msra.mxu0 0
        %1057 = vmatprep.subr.bf16.mxu0 0
        %1058 = vmatpush1.bf16.msra.mxu0 0
        %1059 = vmatprep.subr.bf16.mxu0 0
        %1060 = vmatpush1.bf16.msra.mxu0 0
        %1061 = vmatprep.subr.bf16.mxu0 0
        %1062 = vmatpush1.bf16.msra.mxu0 0
        %1063 = vmatprep.subr.bf16.mxu0 0
        %1064 = vmatpush1.bf16.msra.mxu0 0
        %1065 = vmatprep.subr.bf16.mxu0 0
        %1066 = vmatpush1.bf16.msra.mxu0 0
        %1067 = vmatprep.subr.bf16.mxu0 0
        %1068 = vmatpush1.bf16.msra.mxu0 0
        %1069 = vmatprep.subr.bf16.mxu0 0
        %1070 = vmatpush1.bf16.msra.mxu0 0
        %1071 = vmatprep.subr.bf16.mxu0 0
        %1072 = vmatpush1.bf16.msra.mxu0 0
        %1073 = vmatprep.subr.bf16.mxu0 0
        %1074 = vmatpush1.bf16.msra.mxu0 0
        %1075 = vmatprep.mubr.bf16.mxu0 0
        %1076 = vmatmul.mubr.bf16.gmra.mrb[0].mxu0 %v1041
        %v1077 = vpop.f32.mrb[0].mxu0
        %v1078 = vadd.f32 %v1026, %v1077
        %v1079 = vpop.f32.mrb[0].mxu0
        %v1080 = vpop.f32.mrb[0].mxu0
        %v1081 = vpop.f32.mrb[0].mxu0
        %1082 = vdwg.mxu0
        %v1083 = vmul.f32 %v1078, 0.5
        %v1084 = vmul.f32 %v1078, 0.044715
        %v1085 = vmul.f32 %v1084, %v1078
        %v1086 = vmul.f32 %v1085, %v1078
        %v1087 = vadd.f32 %v1078, %v1086
        %v1088 = vmul.f32 %v1087, 0.7978846
        %v1089 = vtanh.pop %v1088
        %v1090 = vadd.f32 %v1089, 1.0
        %v1091 = vmul.f32 %v1083, %v1090
        %v1092 = vpack.c.bf16 %v1091, %v1091
        %v1093 = vld [vmem:[%s12] sm:$0xf]
        %v1094 = vld [vmem:[%s12 + $0x4] sm:$0xf]
        %v1095 = vld [vmem:[%s12 + $0x8] sm:$0xf]
        %v1096 = vld [vmem:[%s12 + $0xc] sm:$0xf]
        %v1097 = vld [vmem:[%s12 + $0x10] sm:$0xf]
        %v1098 = vld [vmem:[%s12 + $0x14] sm:$0xf]
        %v1099 = vld [vmem:[%s12 + $0x18] sm:$0xf]
        %v1100 = vld [vmem:[%s12 + $0x1c] sm:$0xf]
        %v1101 = vld [vmem:[%s13] sm:$0x1]
        %v1103 = vlaneseq
        %v1104 = vshrl.u32 %v1103, 7
        %v1105 = vsub.s32 0, %v1104
        %v1106 = vrot.slane %v1101, %v1105
        %v1116 = vunpack.c.l.b16 %v1093
        %v1117 = vunpack.c.l.b16 %v1094
        %v1118 = vunpack.c.l.b16 %v1095
        %v1119 = vunpack.c.l.b16 %v1096
        %v1120 = vunpack.c.l.b16 %v1097
        %v1121 = vunpack.c.l.b16 %v1098
        %v1122 = vunpack.c.l.b16 %v1099
        %v1123 = vunpack.c.l.b16 %v1100
        %v1124 = vpack.c.b16 %v1117, %v1116
        %v1125 = vpack.c.b16 %v1119, %v1118
        %v1126 = vpack.c.b16 %v1121, %v1120
        %v1127 = vpack.c.b16 %v1123, %v1122
        %vm1132 = vcmask 523264
        %v1134 = vsel %vm1132, %v1092, 0
        %1136 = vmatprep.subr.bf16.mxu0 0
        %1137 = vmatpush1.bf16.msra.mxu0 %v1124
        %1138 = vmatprep.subr.bf16.mxu0 0
        %1139 = vmatpush1.bf16.msra.mxu0 %v1125
        %1140 = vmatprep.subr.bf16.mxu0 0
        %1141 = vmatpush1.bf16.msra.mxu0 %v1126
        %1142 = vmatprep.subr.bf16.mxu0 0
        %1143 = vmatpush1.bf16.msra.mxu0 %v1127
        %1144 = vmatprep.subr.bf16.mxu0 0
        %1145 = vmatpush1.bf16.msra.mxu0 0
        %1146 = vmatprep.subr.bf16.mxu0 0
        %1147 = vmatpush1.bf16.msra.mxu0 0
        %1148 = vmatprep.subr.bf16.mxu0 0
        %1149 = vmatpush1.bf16.msra.mxu0 0
        %1150 = vmatprep.subr.bf16.mxu0 0
        %1151 = vmatpush1.bf16.msra.mxu0 0
        %1152 = vmatprep.subr.bf16.mxu0 0
        %1153 = vmatpush1.bf16.msra.mxu0 0
        %1154 = vmatprep.subr.bf16.mxu0 0
        %1155 = vmatpush1.bf16.msra.mxu0 0
        %1156 = vmatprep.subr.bf16.mxu0 0
        %1157 = vmatpush1.bf16.msra.mxu0 0
        %1158 = vmatprep.subr.bf16.mxu0 0
        %1159 = vmatpush1.bf16.msra.mxu0 0
        %1160 = vmatprep.subr.bf16.mxu0 0
        %1161 = vmatpush1.bf16.msra.mxu0 0
        %1162 = vmatprep.subr.bf16.mxu0 0
        %1163 = vmatpush1.bf16.msra.mxu0 0
        %1164 = vmatprep.subr.bf16.mxu0 0
        %1165 = vmatpush1.bf16.msra.mxu0 0
        %1166 = vmatprep.subr.bf16.mxu0 0
        %1167 = vmatpush1.bf16.msra.mxu0 0
        %1168 = vmatprep.mubr.bf16.mxu0 0
        %1169 = vmatmul.mubr.bf16.gmra.mrb[0].mxu0 %v1134
        %v1170 = vpop.f32.mrb[0].mxu0
        %v1171 = vadd.f32 %v1106, %v1170
        %v1172 = vpop.f32.mrb[0].mxu0
        %v1173 = vpop.f32.mrb[0].mxu0
        %v1174 = vpop.f32.mrb[0].mxu0
        %1175 = vdwg.mxu0
        %v1176 = vadd.f32 %v1171, %v1015
        %v1177 = vld [vmem:[%s14] sm:$0x1]
        %v1178 = vld [vmem:[%s15] sm:$0x1]
        %v1179 = vsel %vm588, %v1176, 0.0
        %1180 = vadd.xlane.f32.xlu0 %v1179
        %v1181 = vpop.xlane.xlu0 %1180
        %v1182 = vmul.f32 %v1181, %v592
        %v1183 = vsub.f32 %v1176, %v1182
        %v1184 = vmul.f32 %v1183, %v1183
        %v1185 = vsel %vm588, %v1184, 0.0
        %1186 = vadd.xlane.f32.xlu0 %v1185
        %v1187 = vpop.xlane.xlu0 %1186
        %v1188 = vmul.f32 %v1187, %v592
        %v1189 = vadd.f32 %v1188, 1e-12
        %v1190 = vrsqrt.pop %v1189
        %v1191 = vmul.f32 %v1183, %v1190
        %v1193 = vlaneseq
        %v1194 = vshrl.u32 %v1193, 7
        %v1195 = vsub.s32 0, %v1194
        %v1196 = vrot.slane %v1177, %v1195
        %v1198 = vmul.f32 %v1191, %v1196
        %v1200 = vlaneseq
        %v1201 = vshrl.u32 %v1200, 7
        %v1202 = vsub.s32 0, %v1201
        %v1203 = vrot.slane %v1178, %v1202
        %v1205 = vadd.f32 %v1198, %v1203
        %v1206 = vpack.c.bf16 %v1205, %v1205
        %s1207 = scalar_lea.vmem %s4, 16
        %v1208 = vld [vmem:[%s1207] sm:$0xf]
        %v1209 = vld [vmem:[%s1207 + $0x4] sm:$0xf]
        %v1210 = vld [vmem:[%s1207 + $0x8] sm:$0xf]
        %v1211 = vld [vmem:[%s1207 + $0xc] sm:$0xf]
        %s1212 = scalar_lea.vmem %s5, 1
        %v1213 = vld [vmem:[%s1212] sm:$0x1]
        %v1215 = vlaneseq
        %v1216 = vshrl.u32 %v1215, 7
        %v1217 = vsub.s32 0, %v1216
        %v1218 = vrot.slane %v1213, %v1217
        %v1224 = vunpack.c.l.b16 %v1208
        %v1225 = vunpack.c.l.b16 %v1209
        %v1226 = vunpack.c.l.b16 %v1210
        %v1227 = vunpack.c.l.b16 %v1211
        %v1228 = vpack.c.b16 %v1225, %v1224
        %v1229 = vpack.c.b16 %v1227, %v1226
        %v1233 = vsel %vm588, %v1206, 0
        %1235 = vmatprep.subr.bf16.mxu0 0
        %1236 = vmatpush1.bf16.msra.mxu0 %v1228
        %1237 = vmatprep.subr.bf16.mxu0 0
        %1238 = vmatpush1.bf16.msra.mxu0 %v1229
        %1239 = vmatprep.subr.bf16.mxu0 0
        %1240 = vmatpush1.bf16.msra.mxu0 0
        %1241 = vmatprep.subr.bf16.mxu0 0
        %1242 = vmatpush1.bf16.msra.mxu0 0
        %1243 = vmatprep.subr.bf16.mxu0 0
        %1244 = vmatpush1.bf16.msra.mxu0 0
        %1245 = vmatprep.subr.bf16.mxu0 0
        %1246 = vmatpush1.bf16.msra.mxu0 0
        %1247 = vmatprep.subr.bf16.mxu0 0
        %1248 = vmatpush1.bf16.msra.mxu0 0
        %1249 = vmatprep.subr.bf16.mxu0 0
        %1250 = vmatpush1.bf16.msra.mxu0 0
        %1251 = vmatprep.subr.bf16.mxu0 0
        %1252 = vmatpush1.bf16.msra.mxu0 0
        %1253 = vmatprep.subr.bf16.mxu0 0
        %1254 = vmatpush1.bf16.msra.mxu0 0
        %1255 = vmatprep.subr.bf16.mxu0 0
        %1256 = vmatpush1.bf16.msra.mxu0 0
        %1257 = vmatprep.subr.bf16.mxu0 0
        %1258 = vmatpush1.bf16.msra.mxu0 0
        %1259 = vmatprep.subr.bf16.mxu0 0
        %1260 = vmatpush1.bf16.msra.mxu0 0
        %1261 = vmatprep.subr.bf16.mxu0 0
        %1262 = vmatpush1.bf16.msra.mxu0 0
        %1263 = vmatprep.subr.bf16.mxu0 0
        %1264 = vmatpush1.bf16.msra.mxu0 0
        %1265 = vmatprep.subr.bf16.mxu0 0
        %1266 = vmatpush1.bf16.msra.mxu0 0
        %1267 = vmatprep.mubr.bf16.mxu0 0
        %1268 = vmatmul.mubr.bf16.gmra.mrb[0].mxu0 %v1233
        %v1269 = vpop.f32.mrb[0].mxu0
        %v1270 = vadd.f32 %v1218, %v1269
        %v1271 = vpop.f32.mrb[0].mxu0
        %v1272 = vpop.f32.mrb[0].mxu0
        %v1273 = vpop.f32.mrb[0].mxu0
        %1274 = vdwg.mxu0
        %v1275 = vpack.c.bf16 %v1270, %v1270
        %1277 = vrot.lane.b32.xlu0 %v1275, 96
        %v1278 = vpop.permute.xlu0 %1277
        %v1280 = vsel %vm695, %v1275, 0
        %v1283 = vsel %vm695, %v1278, 0
        %1285 = vmatprep.subr.bf16.mxu0 0
        %1286 = vmatpush1.bf16.xpose.msra.mxu0 %v1283
        %1287 = vmatprep.subr.bf16.mxu0 0
        %1288 = vmatpush1.bf16.xpose.msra.mxu0 0
        %1289 = vmatprep.subr.bf16.mxu0 0
        %1290 = vmatpush1.bf16.xpose.msra.mxu0 0
        %1291 = vmatprep.subr.bf16.mxu0 0
        %1292 = vmatpush1.bf16.xpose.msra.mxu0 0
        %1293 = vmatprep.subr.bf16.mxu0 0
        %1294 = vmatpush1.bf16.xpose.msra.mxu0 0
        %1295 = vmatprep.subr.bf16.mxu0 0
        %1296 = vmatpush1.bf16.xpose.msra.mxu0 0
        %1297 = vmatprep.subr.bf16.mxu0 0
        %1298 = vmatpush1.bf16.xpose.msra.mxu0 0
        %1299 = vmatprep.subr.bf16.mxu0 0
        %1300 = vmatpush1.bf16.xpose.msra.mxu0 0
        %1301 = vmatprep.subr.bf16.mxu0 0
        %1302 = vmatpush1.bf16.xpose.msra.mxu0 0
        %1303 = vmatprep.subr.bf16.mxu0 0
        %1304 = vmatpush1.bf16.xpose.msra.mxu0 0
        %1305 = vmatprep.subr.bf16.mxu0 0
        %1306 = vmatpush1.bf16.xpose.msra.mxu0 0
        %1307 = vmatprep.subr.bf16.mxu0 0
        %1308 = vmatpush1.bf16.xpose.msra.mxu0 0
        %1309 = vmatprep.subr.bf16.mxu0 0
        %1310 = vmatpush1.bf16.xpose.msra.mxu0 0
        %1311 = vmatprep.subr.bf16.mxu0 0
        %1312 = vmatpush1.bf16.xpose.msra.mxu0 0
        %1313 = vmatprep.subr.bf16.mxu0 0
        %1314 = vmatpush1.bf16.xpose.msra.mxu0 0
        %1315 = vmatprep.subr.bf16.mxu0 0
        %1316 = vmatpush1.bf16.xpose.msra.mxu0 0
        %1317 = vmatprep.mubr.bf16.mxu0 0
        %1318 = vmatmul.mubr.bf16.gmra.mrb[0].mxu0 %v1280
        %v1319 = vpop.f32.mrb[0].mxu0
        %v1320 = vadd.f32 %v690, %v1319
        %v1321 = vpop.f32.mrb[0].mxu0
        %v1322 = vpop.f32.mrb[0].mxu0
        %v1323 = vpop.f32.mrb[0].mxu0
        %1324 = vdwg.mxu0
        %v1325 = vsel %vm742, %v1320, -inf
        %1326 = vmax.xlane.f32.xlu0 %v1325
        %v1327 = vpop.xlane.xlu0 %1326
        %v1328 = vsub.f32 %v1320, %v1327
        %v1329 = vmul.f32 %v1328, 1.442695
        %v1330 = vpow.pop %v1329
        %v1331 = vsel %vm742, %v1330, 0.0
        %1332 = vadd.xlane.f32.xlu0 %v1331
        %v1333 = vpop.xlane.xlu0 %1332
        %v1334 = vrcp.pop %v1333
        %v1335 = vmul.f32 %v1330, %v1334
        %v1336 = vpack.c.bf16 %v1335, %v1335
        %1337 = vrot.lane.b32.xlu0 %v1275, 64
        %v1338 = vpop.permute.xlu0 %1337
        %v1340 = vsel %vm742, %v1336, 0
        %v1343 = vsel %vm760, %v1338, 0
        %1345 = vmatprep.subr.bf16.mxu0 0
        %1346 = vmatpush1.bf16.msra.mxu0 %v1343
        %1347 = vmatprep.subr.bf16.mxu0 0
        %1348 = vmatpush1.bf16.msra.mxu0 0
        %1349 = vmatprep.subr.bf16.mxu0 0
        %1350 = vmatpush1.bf16.msra.mxu0 0
        %1351 = vmatprep.subr.bf16.mxu0 0
        %1352 = vmatpush1.bf16.msra.mxu0 0
        %1353 = vmatprep.subr.bf16.mxu0 0
        %1354 = vmatpush1.bf16.msra.mxu0 0
        %1355 = vmatprep.subr.bf16.mxu0 0
        %1356 = vmatpush1.bf16.msra.mxu0 0
        %1357 = vmatprep.subr.bf16.mxu0 0
        %1358 = vmatpush1.bf16.msra.mxu0 0
        %1359 = vmatprep.subr.bf16.mxu0 0
        %1360 = vmatpush1.bf16.msra.mxu0 0
        %1361 = vmatprep.subr.bf16.mxu0 0
        %1362 = vmatpush1.bf16.msra.mxu0 0
        %1363 = vmatprep.subr.bf16.mxu0 0
        %1364 = vmatpush1.bf16.msra.mxu0 0
        %1365 = vmatprep.subr.bf16.mxu0 0
        %1366 = vmatpush1.bf16.msra.mxu0 0
        %1367 = vmatprep.subr.bf16.mxu0 0
        %1368 = vmatpush1.bf16.msra.mxu0 0
        %1369 = vmatprep.subr.bf16.mxu0 0
        %1370 = vmatpush1.bf16.msra.mxu0 0
        %1371 = vmatprep.subr.bf16.mxu0 0
        %1372 = vmatpush1.bf16.msra.mxu0 0
        %1373 = vmatprep.subr.bf16.mxu0 0
        %1374 = vmatpush1.bf16.msra.mxu0 0
        %1375 = vmatprep.subr.bf16.mxu0 0
        %1376 = vmatpush1.bf16.msra.mxu0 0
        %1377 = vmatprep.mubr.bf16.mxu0 0
        %1378 = vmatmul.mubr.bf16.gmra.mrb[0].mxu0 %v1340
        %v1379 = vpop.f32.mrb[0].mxu0
        %v1380 = vadd.f32 0.0, %v1379
        %v1381 = vpop.f32.mrb[0].mxu0
        %v1382 = vpop.f32.mrb[0].mxu0
        %v1383 = vpop.f32.mrb[0].mxu0
        %1384 = vdwg.mxu0
        %1385 = vrot.lane.b32.xlu0 %v1275, 112
        %v1386 = vpop.permute.xlu0 %1385
        %1387 = vrot.lane.b32.xlu0 %v1275, 80
        %v1388 = vpop.permute.xlu0 %1387
        %v1390 = vsel %vm695, %v1386, 0
        %v1393 = vsel %vm695, %v1388, 0
        %1395 = vmatprep.subr.bf16.mxu0 0
        %1396 = vmatpush1.bf16.xpose.msra.mxu0 %v1393
        %1397 = vmatprep.subr.bf16.mxu0 0
        %1398 = vmatpush1.bf16.xpose.msra.mxu0 0
        %1399 = vmatprep.subr.bf16.mxu0 0
        %1400 = vmatpush1.bf16.xpose.msra.mxu0 0
        %1401 = vmatprep.subr.bf16.mxu0 0
        %1402 = vmatpush1.bf16.xpose.msra.mxu0 0
        %1403 = vmatprep.subr.bf16.mxu0 0
        %1404 = vmatpush1.bf16.xpose.msra.mxu0 0
        %1405 = vmatprep.subr.bf16.mxu0 0
        %1406 = vmatpush1.bf16.xpose.msra.mxu0 0
        %1407 = vmatprep.subr.bf16.mxu0 0
        %1408 = vmatpush1.bf16.xpose.msra.mxu0 0
        %1409 = vmatprep.subr.bf16.mxu0 0
        %1410 = vmatpush1.bf16.xpose.msra.mxu0 0
        %1411 = vmatprep.subr.bf16.mxu0 0
        %1412 = vmatpush1.bf16.xpose.msra.mxu0 0
        %1413 = vmatprep.subr.bf16.mxu0 0
        %1414 = vmatpush1.bf16.xpose.msra.mxu0 0
        %1415 = vmatprep.subr.bf16.mxu0 0
        %1416 = vmatpush1.bf16.xpose.msra.mxu0 0
        %1417 = vmatprep.subr.bf16.mxu0 0
        %1418 = vmatpush1.bf16.xpose.msra.mxu0 0
        %1419 = vmatprep.subr.bf16.mxu0 0
        %1420 = vmatpush1.bf16.xpose.msra.mxu0 0
        %1421 = vmatprep.subr.bf16.mxu0 0
        %1422 = vmatpush1.bf16.xpose.msra.mxu0 0
        %1423 = vmatprep.subr.bf16.mxu0 0
        %1424 = vmatpush1.bf16.xpose.msra.mxu0 0
        %1425 = vmatprep.subr.bf16.mxu0 0
        %1426 = vmatpush1.bf16.xpose.msra.mxu0 0
        %1427 = vmatprep.mubr.bf16.mxu0 0
        %1428 = vmatmul.mubr.bf16.gmra.mrb[0].mxu0 %v1390
        %v1429 = vpop.f32.mrb[0].mxu0
        %v1430 = vadd.f32 %v690, %v1429
        %v1431 = vpop.f32.mrb[0].mxu0
        %v1432 = vpop.f32.mrb[0].mxu0
        %v1433 = vpop.f32.mrb[0].mxu0
        %1434 = vdwg.mxu0
        %v1435 = vsel %vm742, %v1430, -inf
        %1436 = vmax.xlane.f32.xlu0 %v1435
        %v1437 = vpop.xlane.xlu0 %1436
        %v1438 = vsub.f32 %v1430, %v1437
        %v1439 = vmul.f32 %v1438, 1.442695
        %v1440 = vpow.pop %v1439
        %v1441 = vsel %vm742, %v1440, 0.0
        %1442 = vadd.xlane.f32.xlu0 %v1441
        %v1443 = vpop.xlane.xlu0 %1442
        %v1444 = vrcp.pop %v1443
        %v1445 = vmul.f32 %v1440, %v1444
        %v1446 = vpack.c.bf16 %v1445, %v1445
        %1447 = vrot.lane.b32.xlu0 %v1275, 48
        %v1448 = vpop.permute.xlu0 %1447
        %v1450 = vsel %vm742, %v1446, 0
        %v1453 = vsel %vm760, %v1448, 0
        %1455 = vmatprep.subr.bf16.mxu0 0
        %1456 = vmatpush1.bf16.msra.mxu0 %v1453
        %1457 = vmatprep.subr.bf16.mxu0 0
        %1458 = vmatpush1.bf16.msra.mxu0 0
        %1459 = vmatprep.subr.bf16.mxu0 0
        %1460 = vmatpush1.bf16.msra.mxu0 0
        %1461 = vmatprep.subr.bf16.mxu0 0
        %1462 = vmatpush1.bf16.msra.mxu0 0
        %1463 = vmatprep.subr.bf16.mxu0 0
        %1464 = vmatpush1.bf16.msra.mxu0 0
        %1465 = vmatprep.subr.bf16.mxu0 0
        %1466 = vmatpush1.bf16.msra.mxu0 0
        %1467 = vmatprep.subr.bf16.mxu0 0
        %1468 = vmatpush1.bf16.msra.mxu0 0
        %1469 = vmatprep.subr.bf16.mxu0 0
        %1470 = vmatpush1.bf16.msra.mxu0 0
        %1471 = vmatprep.subr.bf16.mxu0 0
        %1472 = vmatpush1.bf16.msra.mxu0 0
        %1473 = vmatprep.subr.bf16.mxu0 0
        %1474 = vmatpush1.bf16.msra.mxu0 0
        %1475 = vmatprep.subr.bf16.mxu0 0
        %1476 = vmatpush1.bf16.msra.mxu0 0
        %1477 = vmatprep.subr.bf16.mxu0 0
        %1478 = vmatpush1.bf16.msra.mxu0 0
        %1479 = vmatprep.subr.bf16.mxu0 0
        %1480 = vmatpush1.bf16.msra.mxu0 0
        %1481 = vmatprep.subr.bf16.mxu0 0
        %1482 = vmatpush1.bf16.msra.mxu0 0
        %1483 = vmatprep.subr.bf16.mxu0 0
        %1484 = vmatpush1.bf16.msra.mxu0 0
        %1485 = vmatprep.subr.bf16.mxu0 0
        %1486 = vmatpush1.bf16.msra.mxu0 0
        %1487 = vmatprep.mubr.bf16.mxu0 0
        %1488 = vmatmul.mubr.bf16.gmra.mrb[0].mxu0 %v1450
        %v1489 = vpop.f32.mrb[0].mxu0
        %v1490 = vadd.f32 0.0, %v1489
        %v1491 = vpop.f32.mrb[0].mxu0
        %v1492 = vpop.f32.mrb[0].mxu0
        %v1493 = vpop.f32.mrb[0].mxu0
        %1494 = vdwg.mxu0
        %1496 = vrot.lane.b32.xlu0 %v1490, 16
        %v1497 = vpop.permute.xlu0 %1496
        %v1499 = vsel %vm695, %v1380, %v1497
        %v1500 = vpack.c.bf16 %v1499, %v1499
        %s1501 = scalar_lea.vmem %s6, 16
        %v1502 = vld [vmem:[%s1501] sm:$0xf]
        %v1503 = vld [vmem:[%s1501 + $0x4] sm:$0xf]
        %v1504 = vld [vmem:[%s1501 + $0x8] sm:$0xf]
        %v1505 = vld [vmem:[%s1501 + $0xc] sm:$0xf]
        %s1506 = scalar_lea.vmem %s7, 1
        %v1507 = vld [vmem:[%s1506] sm:$0x1]
        %v1509 = vlaneseq
        %v1510 = vshrl.u32 %v1509, 7
        %v1511 = vsub.s32 0, %v1510
        %v1512 = vrot.slane %v1507, %v1511
        %v1518 = vunpack.c.l.b16 %v1502
        %v1519 = vunpack.c.l.b16 %v1503
        %v1520 = vunpack.c.l.b16 %v1504
        %v1521 = vunpack.c.l.b16 %v1505
        %v1522 = vpack.c.b16 %v1519, %v1518
        %v1523 = vpack.c.b16 %v1521, %v1520
        %v1527 = vsel %vm588, %v1500, 0
        %1529 = vmatprep.subr.bf16.mxu0 0
        %1530 = vmatpush1.bf16.msra.mxu0 %v1522
        %1531 = vmatprep.subr.bf16.mxu0 0
        %1532 = vmatpush1.bf16.msra.mxu0 %v1523
        %1533 = vmatprep.subr.bf16.mxu0 0
        %1534 = vmatpush1.bf16.msra.mxu0 0
        %1535 = vmatprep.subr.bf16.mxu0 0
        %1536 = vmatpush1.bf16.msra.mxu0 0
        %1537 = vmatprep.subr.bf16.mxu0 0
        %1538 = vmatpush1.bf16.msra.mxu0 0
        %1539 = vmatprep.subr.bf16.mxu0 0
        %1540 = vmatpush1.bf16.msra.mxu0 0
        %1541 = vmatprep.subr.bf16.mxu0 0
        %1542 = vmatpush1.bf16.msra.mxu0 0
        %1543 = vmatprep.subr.bf16.mxu0 0
        %1544 = vmatpush1.bf16.msra.mxu0 0
        %1545 = vmatprep.subr.bf16.mxu0 0
        %1546 = vmatpush1.bf16.msra.mxu0 0
        %1547 = vmatprep.subr.bf16.mxu0 0
        %1548 = vmatpush1.bf16.msra.mxu0 0
        %1549 = vmatprep.subr.bf16.mxu0 0
        %1550 = vmatpush1.bf16.msra.mxu0 0
        %1551 = vmatprep.subr.bf16.mxu0 0
        %1552 = vmatpush1.bf16.msra.mxu0 0
        %1553 = vmatprep.subr.bf16.mxu0 0
        %1554 = vmatpush1.bf16.msra.mxu0 0
        %1555 = vmatprep.subr.bf16.mxu0 0
        %1556 = vmatpush1.bf16.msra.mxu0 0
        %1557 = vmatprep.subr.bf16.mxu0 0
        %1558 = vmatpush1.bf16.msra.mxu0 0
        %1559 = vmatprep.subr.bf16.mxu0 0
        %1560 = vmatpush1.bf16.msra.mxu0 0
        %1561 = vmatprep.mubr.bf16.mxu0 0
        %1562 = vmatmul.mubr.bf16.gmra.mrb[0].mxu0 %v1527
        %v1563 = vpop.f32.mrb[0].mxu0
        %v1564 = vadd.f32 %v1512, %v1563
        %v1565 = vpop.f32.mrb[0].mxu0
        %v1566 = vpop.f32.mrb[0].mxu0
        %v1567 = vpop.f32.mrb[0].mxu0
        %1568 = vdwg.mxu0
        %v1569 = vadd.f32 %v1564, %v1205
        %s1570 = scalar_lea.vmem %s8, 1
        %v1571 = vld [vmem:[%s1570] sm:$0x1]
        %s1572 = scalar_lea.vmem %s9, 1
        %v1573 = vld [vmem:[%s1572] sm:$0x1]
        %v1574 = vsel %vm588, %v1569, 0.0
        %1575 = vadd.xlane.f32.xlu0 %v1574
        %v1576 = vpop.xlane.xlu0 %1575
        %v1577 = vmul.f32 %v1576, %v592
        %v1578 = vsub.f32 %v1569, %v1577
        %v1579 = vmul.f32 %v1578, %v1578
        %v1580 = vsel %vm588, %v1579, 0.0
        %1581 = vadd.xlane.f32.xlu0 %v1580
        %v1582 = vpop.xlane.xlu0 %1581
        %v1583 = vmul.f32 %v1582, %v592
        %v1584 = vadd.f32 %v1583, 1e-12
        %v1585 = vrsqrt.pop %v1584
        %v1586 = vmul.f32 %v1578, %v1585
        %v1588 = vlaneseq
        %v1589 = vshrl.u32 %v1588, 7
        %v1590 = vsub.s32 0, %v1589
        %v1591 = vrot.slane %v1571, %v1590
        %v1593 = vmul.f32 %v1586, %v1591
        %v1595 = vlaneseq
        %v1596 = vshrl.u32 %v1595, 7
        %v1597 = vsub.s32 0, %v1596
        %v1598 = vrot.slane %v1573, %v1597
        %v1600 = vadd.f32 %v1593, %v1598
        %v1601 = vpack.c.bf16 %v1600, %v1600
        %s1602 = scalar_lea.vmem %s10, 16
        %v1603 = vld [vmem:[%s1602] sm:$0xf]
        %v1604 = vld [vmem:[%s1602 + $0x4] sm:$0xf]
        %v1605 = vld [vmem:[%s1602 + $0x8] sm:$0xf]
        %v1606 = vld [vmem:[%s1602 + $0xc] sm:$0xf]
        %s1607 = scalar_lea.vmem %s11, 1
        %v1608 = vld [vmem:[%s1607] sm:$0x1]
        %v1610 = vlaneseq
        %v1611 = vshrl.u32 %v1610, 7
        %v1612 = vsub.s32 0, %v1611
        %v1613 = vrot.slane %v1608, %v1612
        %v1619 = vunpack.c.l.b16 %v1603
        %v1620 = vunpack.c.l.b16 %v1604
        %v1621 = vunpack.c.l.b16 %v1605
        %v1622 = vunpack.c.l.b16 %v1606
        %v1623 = vpack.c.b16 %v1620, %v1619
        %v1624 = vpack.c.b16 %v1622, %v1621
        %v1628 = vsel %vm588, %v1601, 0
        %1630 = vmatprep.subr.bf16.mxu0 0
        %1631 = vmatpush1.bf16.msra.mxu0 %v1623
        %1632 = vmatprep.subr.bf16.mxu0 0
        %1633 = vmatpush1.bf16.msra.mxu0 %v1624
        %1634 = vmatprep.subr.bf16.mxu0 0
        %1635 = vmatpush1.bf16.msra.mxu0 0
        %1636 = vmatprep.subr.bf16.mxu0 0
        %1637 = vmatpush1.bf16.msra.mxu0 0
        %1638 = vmatprep.subr.bf16.mxu0 0
        %1639 = vmatpush1.bf16.msra.mxu0 0
        %1640 = vmatprep.subr.bf16.mxu0 0
        %1641 = vmatpush1.bf16.msra.mxu0 0
        %1642 = vmatprep.subr.bf16.mxu0 0
        %1643 = vmatpush1.bf16.msra.mxu0 0
        %1644 = vmatprep.subr.bf16.mxu0 0
        %1645 = vmatpush1.bf16.msra.mxu0 0
        %1646 = vmatprep.subr.bf16.mxu0 0
        %1647 = vmatpush1.bf16.msra.mxu0 0
        %1648 = vmatprep.subr.bf16.mxu0 0
        %1649 = vmatpush1.bf16.msra.mxu0 0
        %1650 = vmatprep.subr.bf16.mxu0 0
        %1651 = vmatpush1.bf16.msra.mxu0 0
        %1652 = vmatprep.subr.bf16.mxu0 0
        %1653 = vmatpush1.bf16.msra.mxu0 0
        %1654 = vmatprep.subr.bf16.mxu0 0
        %1655 = vmatpush1.bf16.msra.mxu0 0
        %1656 = vmatprep.subr.bf16.mxu0 0
        %1657 = vmatpush1.bf16.msra.mxu0 0
        %1658 = vmatprep.subr.bf16.mxu0 0
        %1659 = vmatpush1.bf16.msra.mxu0 0
        %1660 = vmatprep.subr.bf16.mxu0 0
        %1661 = vmatpush1.bf16.msra.mxu0 0
        %1662 = vmatprep.mubr.bf16.mxu0 0
        %1663 = vmatmul.mubr.bf16.gmra.mrb[0].mxu0 %v1628
        %v1664 = vpop.f32.mrb[0].mxu0
        %v1665 = vadd.f32 %v1613, %v1664
        %v1666 = vpop.f32.mrb[0].mxu0
        %v1667 = vpop.f32.mrb[0].mxu0
        %v1668 = vpop.f32.mrb[0].mxu0
        %1669 = vdwg.mxu0
        %v1670 = vmul.f32 %v1665, 0.5
        %v1671 = vmul.f32 %v1665, 0.044715
        %v1672 = vmul.f32 %v1671, %v1665
        %v1673 = vmul.f32 %v1672, %v1665
        %v1674 = vadd.f32 %v1665, %v1673
        %v1675 = vmul.f32 %v1674, 0.7978846
        %v1676 = vtanh.pop %v1675
        %v1677 = vadd.f32 %v1676, 1.0
        %v1678 = vmul.f32 %v1670, %v1677
        %v1679 = vpack.c.bf16 %v1678, %v1678
        %s1680 = scalar_lea.vmem %s12, 32
        %v1681 = vld [vmem:[%s1680] sm:$0xf]
        %v1682 = vld [vmem:[%s1680 + $0x4] sm:$0xf]
        %v1683 = vld [vmem:[%s1680 + $0x8] sm:$0xf]
        %v1684 = vld [vmem:[%s1680 + $0xc] sm:$0xf]
        %v1685 = vld [vmem:[%s1680 + $0x10] sm:$0xf]
        %v1686 = vld [vmem:[%s1680 + $0x14] sm:$0xf]
        %v1687 = vld [vmem:[%s1680 + $0x18] sm:$0xf]
        %v1688 = vld [vmem:[%s1680 + $0x1c] sm:$0xf]
        %s1689 = scalar_lea.vmem %s13, 1
        %v1690 = vld [vmem:[%s1689] sm:$0x1]
        %v1692 = vlaneseq
        %v1693 = vshrl.u32 %v1692, 7
        %v1694 = vsub.s32 0, %v1693
        %v1695 = vrot.slane %v1690, %v1694
        %v1705 = vunpack.c.l.b16 %v1681
        %v1706 = vunpack.c.l.b16 %v1682
        %v1707 = vunpack.c.l.b16 %v1683
        %v1708 = vunpack.c.l.b16 %v1684
        %v1709 = vunpack.c.l.b16 %v1685
        %v1710 = vunpack.c.l.b16 %v1686
        %v1711 = vunpack.c.l.b16 %v1687
        %v1712 = vunpack.c.l.b16 %v1688
        %v1713 = vpack.c.b16 %v1706, %v1705
        %v1714 = vpack.c.b16 %v1708, %v1707
        %v1715 = vpack.c.b16 %v1710, %v1709
        %v1716 = vpack.c.b16 %v1712, %v1711
        %v1722 = vsel %vm1132, %v1679, 0
        %1724 = vmatprep.subr.bf16.mxu0 0
        %1725 = vmatpush1.bf16.msra.mxu0 %v1713
        %1726 = vmatprep.subr.bf16.mxu0 0
        %1727 = vmatpush1.bf16.msra.mxu0 %v1714
        %1728 = vmatprep.subr.bf16.mxu0 0
        %1729 = vmatpush1.bf16.msra.mxu0 %v1715
        %1730 = vmatprep.subr.bf16.mxu0 0
        %1731 = vmatpush1.bf16.msra.mxu0 %v1716
        %1732 = vmatprep.subr.bf16.mxu0 0
        %1733 = vmatpush1.bf16.msra.mxu0 0
        %1734 = vmatprep.subr.bf16.mxu0 0
        %1735 = vmatpush1.bf16.msra.mxu0 0
        %1736 = vmatprep.subr.bf16.mxu0 0
        %1737 = vmatpush1.bf16.msra.mxu0 0
        %1738 = vmatprep.subr.bf16.mxu0 0
        %1739 = vmatpush1.bf16.msra.mxu0 0
        %1740 = vmatprep.subr.bf16.mxu0 0
        %1741 = vmatpush1.bf16.msra.mxu0 0
        %1742 = vmatprep.subr.bf16.mxu0 0
        %1743 = vmatpush1.bf16.msra.mxu0 0
        %1744 = vmatprep.subr.bf16.mxu0 0
        %1745 = vmatpush1.bf16.msra.mxu0 0
        %1746 = vmatprep.subr.bf16.mxu0 0
        %1747 = vmatpush1.bf16.msra.mxu0 0
        %1748 = vmatprep.subr.bf16.mxu0 0
        %1749 = vmatpush1.bf16.msra.mxu0 0
        %1750 = vmatprep.subr.bf16.mxu0 0
        %1751 = vmatpush1.bf16.msra.mxu0 0
        %1752 = vmatprep.subr.bf16.mxu0 0
        %1753 = vmatpush1.bf16.msra.mxu0 0
        %1754 = vmatprep.subr.bf16.mxu0 0
        %1755 = vmatpush1.bf16.msra.mxu0 0
        %1756 = vmatprep.mubr.bf16.mxu0 0
        %1757 = vmatmul.mubr.bf16.gmra.mrb[0].mxu0 %v1722
        %v1758 = vpop.f32.mrb[0].mxu0
        %v1759 = vadd.f32 %v1695, %v1758
        %v1760 = vpop.f32.mrb[0].mxu0
        %v1761 = vpop.f32.mrb[0].mxu0
        %v1762 = vpop.f32.mrb[0].mxu0
        %1763 = vdwg.mxu0
        %v1764 = vadd.f32 %v1759, %v1600
        %s1765 = scalar_lea.vmem %s14, 1
        %v1766 = vld [vmem:[%s1765] sm:$0x1]
        %s1767 = scalar_lea.vmem %s15, 1
        %v1768 = vld [vmem:[%s1767] sm:$0x1]
        %v1769 = vsel %vm588, %v1764, 0.0
        %1770 = vadd.xlane.f32.xlu0 %v1769
        %v1771 = vpop.xlane.xlu0 %1770
        %v1772 = vmul.f32 %v1771, %v592
        %v1773 = vsub.f32 %v1764, %v1772
        %v1774 = vmul.f32 %v1773, %v1773
        %v1775 = vsel %vm588, %v1774, 0.0
        %1776 = vadd.xlane.f32.xlu0 %v1775
        %v1777 = vpop.xlane.xlu0 %1776
        %v1778 = vmul.f32 %v1777, %v592
        %v1779 = vadd.f32 %v1778, 1e-12
        %v1780 = vrsqrt.pop %v1779
        %v1781 = vmul.f32 %v1773, %v1780
        %v1783 = vlaneseq
        %v1784 = vshrl.u32 %v1783, 7
        %v1785 = vsub.s32 0, %v1784
        %v1786 = vrot.slane %v1766, %v1785
        %v1788 = vmul.f32 %v1781, %v1786
        %v1790 = vlaneseq
        %v1791 = vshrl.u32 %v1790, 7
        %v1792 = vsub.s32 0, %v1791
        %v1793 = vrot.slane %v1768, %v1792
        %v1795 = vadd.f32 %v1788, %v1793
        %v1796 = vpack.c.bf16 %v1795, %v1795
        %v1797 = vld [vmem:[%s16] sm:$0xf]
        %v1798 = vld [vmem:[%s16 + $0x4] sm:$0xf]
        %v1799 = vld [vmem:[%s16 + $0x8] sm:$0xf]
        %v1800 = vld [vmem:[%s16 + $0xc] sm:$0xf]
        %v1801 = vld [vmem:[%s17] sm:$0x1]
        %v1806 = vunpack.c.l.b16 %v1797
        %v1807 = vunpack.c.l.b16 %v1798
        %v1808 = vunpack.c.l.b16 %v1799
        %v1809 = vunpack.c.l.b16 %v1800
        %v1810 = vpack.c.b16 %v1807, %v1806
        %v1811 = vpack.c.b16 %v1809, %v1808
        %v1815 = vsel %vm588, %v1796, 0
        %1817 = vmatprep.subr.bf16.mxu0 0
        %1818 = vmatpush1.bf16.msra.mxu0 %v1810
        %1819 = vmatprep.subr.bf16.mxu0 0
        %1820 = vmatpush1.bf16.msra.mxu0 %v1811
        %1821 = vmatprep.subr.bf16.mxu0 0
        %1822 = vmatpush1.bf16.msra.mxu0 0
        %1823 = vmatprep.subr.bf16.mxu0 0
        %1824 = vmatpush1.bf16.msra.mxu0 0
        %1825 = vmatprep.subr.bf16.mxu0 0
        %1826 = vmatpush1.bf16.msra.mxu0 0
        %1827 = vmatprep.subr.bf16.mxu0 0
        %1828 = vmatpush1.bf16.msra.mxu0 0
        %1829 = vmatprep.subr.bf16.mxu0 0
        %1830 = vmatpush1.bf16.msra.mxu0 0
        %1831 = vmatprep.subr.bf16.mxu0 0
        %1832 = vmatpush1.bf16.msra.mxu0 0
        %1833 = vmatprep.subr.bf16.mxu0 0
        %1834 = vmatpush1.bf16.msra.mxu0 0
        %1835 = vmatprep.subr.bf16.mxu0 0
        %1836 = vmatpush1.bf16.msra.mxu0 0
        %1837 = vmatprep.subr.bf16.mxu0 0
        %1838 = vmatpush1.bf16.msra.mxu0 0
        %1839 = vmatprep.subr.bf16.mxu0 0
        %1840 = vmatpush1.bf16.msra.mxu0 0
        %1841 = vmatprep.subr.bf16.mxu0 0
        %1842 = vmatpush1.bf16.msra.mxu0 0
        %1843 = vmatprep.subr.bf16.mxu0 0
        %1844 = vmatpush1.bf16.msra.mxu0 0
        %1845 = vmatprep.subr.bf16.mxu0 0
        %1846 = vmatpush1.bf16.msra.mxu0 0
        %1847 = vmatprep.subr.bf16.mxu0 0
        %1848 = vmatpush1.bf16.msra.mxu0 0
        %1849 = vmatprep.mubr.bf16.mxu0 0
        %1850 = vmatmul.mubr.bf16.gmra.mrb[0].mxu0 %v1815
        %v1851 = vpop.f32.mrb[0].mxu0
        %v1852 = vadd.f32 %v1801, %v1851
        %v1853 = vpop.f32.mrb[0].mxu0
        %v1854 = vpop.f32.mrb[0].mxu0
        %v1855 = vpop.f32.mrb[0].mxu0
        %1856 = vdwg.mxu0
        %vm1857 = vcmask 57344
        %1858 = vst.msk [vmem:[%s576] sm:$0x1] %vm1857, %v1852
        %s1859 = sand.u32 %s428, 1
        %s1860 = scalar_lea.sflag [#allocation3], %s1859
        %s1861 = sand.u32 %s428, 1
        %s1862 = scalar_lea.vmem [#allocation2], %s1861
        // Predicated region
        $region93: #{sentence_mappings_producer.1} parent=91 // pred_check
          %p1863 = pneg %p438
        $region94: #{sentence_mappings_producer.1} parent=91 // pred_check_branch
          %1865 = sbr.rel (%p1863) target = $region96
        $region95: #{sentence_mappings_producer.1} parent=91 // pred_region
          %s1867 = ssub.s32 16, 16
          %1868 = vsyncadd %s1860, %s1867
          %s1869 = smul.addr %s32, 16
          %s1870 = scalar_lea.hbm %s18, %s1869
          %s1872 = sshll.u32 %s1862, 4
          %s1873 = int_to_ptr.vmem [resolvable:$true] %s1872
          %1875 = dma.vmem_to_hbm [thread:$0]  %s1873, 16, %s1870, %s1860
        $region96: #{sentence_mappings_producer.1} parent=91 // pred_fallthru
          _
      $region92: #{sentence_mappings_producer.1} parent=5 // pred_fallthru
        _
      %p1876 = scmp.le.s32.totalorder 2, %s27
      // Predicated region
      $region97: #{sentence_mappings_producer.1} parent=5 // pred_check
        %p1877 = pneg %p1876
      $region98: #{sentence_mappings_producer.1} parent=5 // pred_check_branch
        %1879 = sbr.rel (%p1877) target = $region100
      $region99: #{sentence_mappings_producer.1} parent=5 // pred_region
        %s1880 = ssub.s32 %s27, 2
        // Predicated region
        $region101: #{sentence_mappings_producer.1} parent=99 // pred_check
          %p1881 = pneg %p444
        $region102: #{sentence_mappings_producer.1} parent=99 // pred_check_branch
          %1883 = sbr.rel (%p1881) target = $region104
        $region103: #{sentence_mappings_producer.1} parent=99 // pred_region
          %s1884 = sand.u32 %s429, 1
          %s1885 = scalar_lea.sflag [#allocation3], %s1884
          %s1886 = sand.u32 %s429, 1
          %s1887 = scalar_lea.vmem [#allocation2], %s1886
          %1888 = dma.done %s1885, 16
        $region104: #{sentence_mappings_producer.1} parent=99 // pred_fallthru
          _
      $region100: #{sentence_mappings_producer.1} parent=5 // pred_fallthru
        _
    $region6: #{sentence_mappings_producer.1} parent=1 // loop_footer
      %s31 = sadd.s32 1, %s27
    $region7: #{sentence_mappings_producer.1} parent=1 // loop_footer_branch
      %26 = sbr.rel target = $region3
    $region8: #{sentence_mappings_producer.1} parent=1 // loop_exit
      _
    %1889 = vsyncpa [#allocation3], 1
    %s1890 = scalar_lea.sflag [#allocation3], 1
    %1891 = vsyncpa %s1890, 1

</llo_original>
